<compile_context>
chip_gen: v7x
topology: tpu7x:2x2x1
jax: 0.10.0
libtpu: 0.0.40
codegen_flags: <defaults>
</compile_context>

<pallas_src>
import math
from functools import partial

import jax
import jax.numpy as jnp
from jax import lax
from jax.experimental import pallas as pl
from jax.experimental.pallas import tpu as pltpu


def _causal_attn_kernel(x_ref, wq_ref, wk_ref, wv_ref, bq_ref, bk_ref, bv_ref,
                        wproj_ref, bproj_ref, o_ref, *, n_head: int, head_dim: int):
    """One grid step = one batch element: Q/K/V projections, all-head causal
    softmax attention via batched einsums, and the output projection."""
    T, C = x_ref.shape[1], x_ref.shape[2]
    dt = x_ref.dtype                               # native operand dtype for the MXU

    x = x_ref[0]                                   # (T, C) — no layout-crossing reshape

    # --- Q/K/V projections: three contiguous (T,C)@(C,C) matmuls, f32 accumulation ---
    q = jnp.dot(x, wq_ref[...], preferred_element_type=jnp.float32) \
        + bq_ref[...].astype(jnp.float32)
    k = jnp.dot(x, wk_ref[...], preferred_element_type=jnp.float32) \
        + bk_ref[...].astype(jnp.float32)
    v = jnp.dot(x, wv_ref[...], preferred_element_type=jnp.float32) \
        + bv_ref[...].astype(jnp.float32)

    scale = 1.0 / math.sqrt(head_dim)
    q = (q * scale).astype(dt).reshape(T, n_head, head_dim)     # scale folded into q
    k = k.astype(dt).reshape(T, n_head, head_dim)
    v = v.astype(dt).reshape(T, n_head, head_dim)

    # --- all heads at once: (H, T, T) scores, f32 ---
    s = jnp.einsum('qhd,khd->hqk', q, k, preferred_element_type=jnp.float32)

    # (T, T) causal mask built once, broadcast over heads (finite sentinel, NaN-free).
    row = lax.broadcasted_iota(jnp.int32, (T, T), 0)
    col = lax.broadcasted_iota(jnp.int32, (T, T), 1)
    s = jnp.where((col <= row)[None, :, :], s, -1e30)

    # f32 softmax; denominator reciprocal on the EUP (off the VALU path).
    m = jnp.max(s, axis=-1, keepdims=True)
    p = jnp.exp(s - m)
    p = p * pl.reciprocal(jnp.sum(p, axis=-1, keepdims=True), approx=True)

    # --- context + merged-head output projection: one (T,C)@(C,C) matmul ---
    y = jnp.einsum('hqk,khd->qhd', p.astype(dt), v,
                   preferred_element_type=jnp.float32)          # (T, H, D) f32
    y = y.reshape(T, C).astype(dt)
    out = jnp.dot(y, wproj_ref[...], preferred_element_type=jnp.float32)
    out = out + bproj_ref[...].astype(jnp.float32)              # (T, C)

    # TODO(synk): attn/resid dropout omitted (eval mode / dropout == 0.0); optional
    # attn_mask path not implemented — kernel covers the is_causal SDPA branch.
    o_ref[0] = out.astype(o_ref.dtype)


def causal_self_attention(x, w_qkv, b_qkv, w_proj, b_proj, *, n_head: int):
    B, T, C = x.shape
    assert C % n_head == 0
    head_dim = C // n_head

    # Wrapper-side split of the fused QKV weight/bias (free one-time XLA work) so the
    # kernel feeds the MXU contiguous full-tile operands and never lane-slices a 3C slab.
    wq, wk, wv = jnp.split(w_qkv, 3, axis=1)       # each (C, C)
    bq, bk, bv = jnp.split(b_qkv, 3, axis=1)       # each (1, C)

    kernel = partial(_causal_attn_kernel, n_head=n_head, head_dim=head_dim)

    itemsize = jnp.dtype(x.dtype).itemsize
    flops = B * (2 * T * C * (3 * C)               # QKV projections
                 + 4 * n_head * T * T * head_dim   # QK^T + PV
                 + 2 * T * C * C)                  # output projection
    bytes_accessed = itemsize * (x.size + w_qkv.size + b_qkv.size
                                 + w_proj.size + b_proj.size + B * T * C)
    cost = pl.CostEstimate(flops=flops,
                           transcendentals=B * n_head * T * T,
                           bytes_accessed=bytes_accessed)

    return pl.pallas_call(
        kernel,
        out_shape=jax.ShapeDtypeStruct((B, T, C), x.dtype),
        grid_spec=pltpu.PrefetchScalarGridSpec(
            num_scalar_prefetch=0,
            grid=(B,),                                            # one step per batch row
            in_specs=[
                pl.BlockSpec((1, T, C), lambda b: (b, 0, 0)),     # x       (per-batch)
                pl.BlockSpec((C, C), lambda b: (0, 0)),           # W_q     (resident)
                pl.BlockSpec((C, C), lambda b: (0, 0)),           # W_k
                pl.BlockSpec((C, C), lambda b: (0, 0)),           # W_v
                pl.BlockSpec((1, C), lambda b: (0, 0)),           # b_q
                pl.BlockSpec((1, C), lambda b: (0, 0)),           # b_k
                pl.BlockSpec((1, C), lambda b: (0, 0)),           # b_v
                pl.BlockSpec((C, C), lambda b: (0, 0)),           # W_proj
                pl.BlockSpec((1, C), lambda b: (0, 0)),           # b_proj
            ],
            out_specs=pl.BlockSpec((1, T, C), lambda b: (b, 0, 0)),
        ),
        compiler_params=pltpu.CompilerParams(
            dimension_semantics=("parallel",),     # shard batch across TCs on v7x
            vmem_limit_bytes=32 * 1024 * 1024,
        ),
        cost_estimate=cost,
    )(x, wq, wk, wv, bq, bk, bv, w_proj, b_proj)


def _reference(x, w_qkv, b_qkv, w_proj, b_proj, n_head):
    """Pure-JAX reference matching torch SDPA (is_causal=True)."""
    B, T, C = x.shape
    D = C // n_head
    qkv = jnp.einsum("btc,cf->btf", x, w_qkv) + b_qkv[0]
    q, k, v = jnp.split(qkv, 3, axis=-1)
    q = q.reshape(B, T, n_head, D).transpose(0, 2, 1, 3)
    k = k.reshape(B, T, n_head, D).transpose(0, 2, 1, 3)
    v = v.reshape(B, T, n_head, D).transpose(0, 2, 1, 3)
    s = jnp.einsum("bhtd,bhsd->bhts", q, k) / math.sqrt(D)
    mask = jnp.tril(jnp.ones((T, T), bool))
    s = jnp.where(mask, s, -jnp.inf)
    p = jax.nn.softmax(s, axis=-1)
    y = jnp.einsum("bhts,bhsd->bhtd", p, v)
    y = y.transpose(0, 2, 1, 3).reshape(B, T, C)
    return jnp.einsum("btc,cf->btf", y, w_proj) + b_proj[0]


if __name__ == "__main__":
    # Config implied by the module: n_embd=32, n_head=4, block_size(T)=8, bias=True, dropout=0.
    B, T, C, H = 2, 8, 32, 4

    key = jax.random.PRNGKey(0)
    kx, k1, k2, k3, k4 = jax.random.split(key, 5)

    x = jax.random.normal(kx, (B, T, C), dtype=jnp.float32)
    w_qkv = 0.02 * jax.random.normal(k1, (C, 3 * C), dtype=jnp.float32)
    b_qkv = 0.02 * jax.random.normal(k2, (1, 3 * C), dtype=jnp.float32)
    w_proj = 0.02 * jax.random.normal(k3, (C, C), dtype=jnp.float32)
    b_proj = 0.02 * jax.random.normal(k4, (1, C), dtype=jnp.float32)

    y = causal_self_attention(x, w_qkv, b_qkv, w_proj, b_proj, n_head=H)
    y = jax.block_until_ready(y)

    y_ref = _reference(x, w_qkv, b_qkv, w_proj, b_proj, H)
    assert y.shape == (B, T, C)
    # Tolerance slightly relaxed vs. exact math because the softmax denominator uses
    # the EUP approximate reciprocal (pl.reciprocal(approx=True)).
    assert jnp.allclose(y, y_ref, atol=1e-3, rtol=1e-3), float(jnp.max(jnp.abs(y - y_ref)))

    print("KERNEL_OK")
</pallas_src>

<mosaic_0001>
module attributes {stable_mosaic.version = 11 : i64} {
  func.func @_causal_attn_kernel(%arg0: i32, %arg1: memref<1x8x32xf32, #tpu.memory_space<vmem>>, %arg2: memref<32x32xf32, #tpu.memory_space<vmem>>, %arg3: memref<32x32xf32, #tpu.memory_space<vmem>>, %arg4: memref<32x32xf32, #tpu.memory_space<vmem>>, %arg5: memref<1x32xf32, #tpu.memory_space<vmem>>, %arg6: memref<1x32xf32, #tpu.memory_space<vmem>>, %arg7: memref<1x32xf32, #tpu.memory_space<vmem>>, %arg8: memref<32x32xf32, #tpu.memory_space<vmem>>, %arg9: memref<1x32xf32, #tpu.memory_space<vmem>>, %arg10: memref<1x8x32xf32, #tpu.memory_space<vmem>>) attributes {dimension_semantics = [#tpu.dimension_semantics<parallel>], iteration_bounds = array<i64: 2>, scalar_prefetch = 0 : i64, scratch_operands = 0 : i64, tpu.core_type = #tpu.core_type<tc>, window_params = [{transform_indices = @transform_0, window_bounds = array<i64: 1, 8, 32>}, {pipeline_mode = #tpu.pipeline_mode<synchronous>, transform_indices = @transform_1, window_bounds = array<i64: 32, 32>}, {pipeline_mode = #tpu.pipeline_mode<synchronous>, transform_indices = @transform_2, window_bounds = array<i64: 32, 32>}, {pipeline_mode = #tpu.pipeline_mode<synchronous>, transform_indices = @transform_3, window_bounds = array<i64: 32, 32>}, {pipeline_mode = #tpu.pipeline_mode<synchronous>, transform_indices = @transform_4, window_bounds = array<i64: 1, 32>}, {pipeline_mode = #tpu.pipeline_mode<synchronous>, transform_indices = @transform_5, window_bounds = array<i64: 1, 32>}, {pipeline_mode = #tpu.pipeline_mode<synchronous>, transform_indices = @transform_6, window_bounds = array<i64: 1, 32>}, {pipeline_mode = #tpu.pipeline_mode<synchronous>, transform_indices = @transform_7, window_bounds = array<i64: 32, 32>}, {pipeline_mode = #tpu.pipeline_mode<synchronous>, transform_indices = @transform_8, window_bounds = array<i64: 1, 32>}, {transform_indices = @transform_9, window_bounds = array<i64: 1, 8, 32>}]} {
    %c0 = arith.constant 0 : index
    %c0_0 = arith.constant 0 : index
    %c0_1 = arith.constant 0 : index
    %0 = vector.load %arg1[%c0, %c0_0, %c0_1] : memref<1x8x32xf32, #tpu.memory_space<vmem>>, vector<1x8x32xf32>
    %1 = vector.shape_cast %0 : vector<1x8x32xf32> to vector<8x32xf32>
    %c0_2 = arith.constant 0 : index
    %c0_3 = arith.constant 0 : index
    %2 = vector.load %arg2[%c0_2, %c0_3] : memref<32x32xf32, #tpu.memory_space<vmem>>, vector<32x32xf32>
    %cst = arith.constant dense<0.000000e+00> : vector<8x32xf32>
    %3 = tpu.matmul %1, %2, %cst {dimension_numbers = #tpu.dot_dimension_numbers<[1], [0], [0], [1], [0, 0, 1, 1], [], []>} : vector<8x32xf32>, vector<32x32xf32>, vector<8x32xf32> -> vector<8x32xf32>
    %c0_4 = arith.constant 0 : index
    %c0_5 = arith.constant 0 : index
    %4 = vector.load %arg5[%c0_4, %c0_5] : memref<1x32xf32, #tpu.memory_space<vmem>>, vector<1x32xf32>
    %5 = vector.broadcast %4 : vector<1x32xf32> to vector<8x32xf32>
    %6 = arith.addf %3, %5 : vector<8x32xf32>
    %c0_6 = arith.constant 0 : index
    %c0_7 = arith.constant 0 : index
    %7 = vector.load %arg3[%c0_6, %c0_7] : memref<32x32xf32, #tpu.memory_space<vmem>>, vector<32x32xf32>
    %cst_8 = arith.constant dense<0.000000e+00> : vector<8x32xf32>
    %8 = tpu.matmul %1, %7, %cst_8 {dimension_numbers = #tpu.dot_dimension_numbers<[1], [0], [0], [1], [0, 0, 1, 1], [], []>} : vector<8x32xf32>, vector<32x32xf32>, vector<8x32xf32> -> vector<8x32xf32>
    %c0_9 = arith.constant 0 : index
    %c0_10 = arith.constant 0 : index
    %9 = vector.load %arg6[%c0_9, %c0_10] : memref<1x32xf32, #tpu.memory_space<vmem>>, vector<1x32xf32>
    %10 = vector.broadcast %9 : vector<1x32xf32> to vector<8x32xf32>
    %11 = arith.addf %8, %10 : vector<8x32xf32>
    %c0_11 = arith.constant 0 : index
    %c0_12 = arith.constant 0 : index
    %12 = vector.load %arg4[%c0_11, %c0_12] : memref<32x32xf32, #tpu.memory_space<vmem>>, vector<32x32xf32>
    %cst_13 = arith.constant dense<0.000000e+00> : vector<8x32xf32>
    %13 = tpu.matmul %1, %12, %cst_13 {dimension_numbers = #tpu.dot_dimension_numbers<[1], [0], [0], [1], [0, 0, 1, 1], [], []>} : vector<8x32xf32>, vector<32x32xf32>, vector<8x32xf32> -> vector<8x32xf32>
    %c0_14 = arith.constant 0 : index
    %c0_15 = arith.constant 0 : index
    %14 = vector.load %arg7[%c0_14, %c0_15] : memref<1x32xf32, #tpu.memory_space<vmem>>, vector<1x32xf32>
    %15 = vector.broadcast %14 : vector<1x32xf32> to vector<8x32xf32>
    %16 = arith.addf %13, %15 : vector<8x32xf32>
    %cst_16 = arith.constant 0.353553385 : f32
    %17 = vector.broadcast %cst_16 : f32 to vector<8x32xf32>
    %18 = arith.mulf %6, %17 : vector<8x32xf32>
    %19 = vector.shape_cast %18 : vector<8x32xf32> to vector<8x4x8xf32>
    %20 = vector.shape_cast %11 : vector<8x32xf32> to vector<8x4x8xf32>
    %21 = vector.shape_cast %16 : vector<8x32xf32> to vector<8x4x8xf32>
    "tpu.trace_start"() <{level = 10 : i32, message = "qhd,khd->hqk"}> : () -> ()
    %cst_17 = arith.constant dense<0.000000e+00> : vector<4x8x8xf32>
    %22 = tpu.matmul %19, %20, %cst_17 {dimension_numbers = #tpu.dot_dimension_numbers<[2], [2], [0], [0], [0, 1, 0, 0, 1, 0], [1], [1]>} : vector<8x4x8xf32>, vector<8x4x8xf32>, vector<4x8x8xf32> -> vector<4x8x8xf32>
    "tpu.trace_stop"() : () -> ()
    %23 = tpu.iota {dimensions = array<i32: 0>} : vector<8x8xi32>
    %24 = tpu.iota {dimensions = array<i32: 1>} : vector<8x8xi32>
    %25 = arith.cmpi sle, %24, %23 : vector<8x8xi32>
    %26 = vector.shape_cast %25 : vector<8x8xi1> to vector<1x8x8xi1>
    %cst_18 = arith.constant -1.000000e+30 : f32
    %27 = vector.shape_cast %26 : vector<1x8x8xi1> to vector<1x8x8xi1>
    %28 = vector.broadcast %27 : vector<1x8x8xi1> to vector<4x8x8xi1>
    %29 = vector.broadcast %cst_18 : f32 to vector<4x8x8xf32>
    %30 = arith.select %28, %22, %29 : vector<4x8x8xi1>, vector<4x8x8xf32>
    %cst_19 = arith.constant dense<0xFF800000> : vector<4x8xf32>
    %31 = vector.multi_reduction <maximumf>, %30, %cst_19 [2] : vector<4x8x8xf32> to vector<4x8xf32>
    %32 = vector.shape_cast %31 : vector<4x8xf32> to vector<4x8x1xf32>
    %33 = vector.broadcast %32 : vector<4x8x1xf32> to vector<4x8x8xf32>
    %34 = arith.subf %30, %33 : vector<4x8x8xf32>
    %35 = math.exp %34 : vector<4x8x8xf32>
    %cst_20 = arith.constant dense<0.000000e+00> : vector<4x8xf32>
    %36 = vector.multi_reduction <add>, %35, %cst_20 [2] : vector<4x8x8xf32> to vector<4x8xf32>
    %37 = vector.shape_cast %36 : vector<4x8xf32> to vector<4x8x1xf32>
    %38 = tpu.reciprocal %37 {approx = true} : vector<4x8x1xf32> -> vector<4x8x1xf32>
    %39 = vector.broadcast %38 : vector<4x8x1xf32> to vector<4x8x8xf32>
    %40 = arith.mulf %35, %39 : vector<4x8x8xf32>
    "tpu.trace_start"() <{level = 10 : i32, message = "hqk,khd->qhd"}> : () -> ()
    %cst_21 = arith.constant dense<0.000000e+00> : vector<4x8x8xf32>
    %41 = tpu.matmul %21, %40, %cst_21 {dimension_numbers = #tpu.dot_dimension_numbers<[0], [2], [2], [1], [0, 1, 0, 2, 1, 1], [1], [0]>} : vector<8x4x8xf32>, vector<4x8x8xf32>, vector<4x8x8xf32> -> vector<4x8x8xf32>
    %42 = tpu.transpose %41, [2, 0, 1] : vector<4x8x8xf32> -> vector<8x4x8xf32>
    "tpu.trace_stop"() : () -> ()
    %43 = vector.shape_cast %42 : vector<8x4x8xf32> to vector<8x32xf32>
    %c0_22 = arith.constant 0 : index
    %c0_23 = arith.constant 0 : index
    %44 = vector.load %arg8[%c0_22, %c0_23] : memref<32x32xf32, #tpu.memory_space<vmem>>, vector<32x32xf32>
    %cst_24 = arith.constant dense<0.000000e+00> : vector<8x32xf32>
    %45 = tpu.matmul %43, %44, %cst_24 {dimension_numbers = #tpu.dot_dimension_numbers<[1], [0], [0], [1], [0, 0, 1, 1], [], []>} : vector<8x32xf32>, vector<32x32xf32>, vector<8x32xf32> -> vector<8x32xf32>
    %c0_25 = arith.constant 0 : index
    %c0_26 = arith.constant 0 : index
    %46 = vector.load %arg9[%c0_25, %c0_26] : memref<1x32xf32, #tpu.memory_space<vmem>>, vector<1x32xf32>
    %47 = vector.broadcast %46 : vector<1x32xf32> to vector<8x32xf32>
    %48 = arith.addf %45, %47 : vector<8x32xf32>
    %c0_27 = arith.constant 0 : index
    %c0_28 = arith.constant 0 : index
    %c0_29 = arith.constant 0 : index
    %49 = vector.load %arg10[%c0_27, %c0_28, %c0_29] : memref<1x8x32xf32, #tpu.memory_space<vmem>>, vector<1x8x32xf32>
    %50 = vector.shape_cast %49 : vector<1x8x32xf32> to vector<8x32xf32>
    %51 = vector.shape_cast %48 : vector<8x32xf32> to vector<1x8x32xf32>
    tpu.vector_store %arg10[%c0_27, %c0_28, %c0_29], %51 {strides = array<i32>} : memref<1x8x32xf32, #tpu.memory_space<vmem>>, vector<1x8x32xf32>,
    return
  }
  func.func @transform_0(%arg0: i32) -> (i32, i32, i32) {
    %c0_i32 = arith.constant 0 : i32
    %c0_i32_0 = arith.constant 0 : i32
    %c0_i32_1 = arith.constant 0 : i32
    return %arg0, %c0_i32, %c0_i32_0 : i32, i32, i32
  }
  func.func @transform_1(%arg0: i32) -> (i32, i32) {
    %c0_i32 = arith.constant 0 : i32
    %c0_i32_0 = arith.constant 0 : i32
    %c0_i32_1 = arith.constant 0 : i32
    return %c0_i32, %c0_i32_0 : i32, i32
  }
  func.func @transform_2(%arg0: i32) -> (i32, i32) {
    %c0_i32 = arith.constant 0 : i32
    %c0_i32_0 = arith.constant 0 : i32
    %c0_i32_1 = arith.constant 0 : i32
    return %c0_i32, %c0_i32_0 : i32, i32
  }
  func.func @transform_3(%arg0: i32) -> (i32, i32) {
    %c0_i32 = arith.constant 0 : i32
    %c0_i32_0 = arith.constant 0 : i32
    %c0_i32_1 = arith.constant 0 : i32
    return %c0_i32, %c0_i32_0 : i32, i32
  }
  func.func @transform_4(%arg0: i32) -> (i32, i32) {
    %c0_i32 = arith.constant 0 : i32
    %c0_i32_0 = arith.constant 0 : i32
    %c0_i32_1 = arith.constant 0 : i32
    return %c0_i32, %c0_i32_0 : i32, i32
  }
  func.func @transform_5(%arg0: i32) -> (i32, i32) {
    %c0_i32 = arith.constant 0 : i32
    %c0_i32_0 = arith.constant 0 : i32
    %c0_i32_1 = arith.constant 0 : i32
    return %c0_i32, %c0_i32_0 : i32, i32
  }
  func.func @transform_6(%arg0: i32) -> (i32, i32) {
    %c0_i32 = arith.constant 0 : i32
    %c0_i32_0 = arith.constant 0 : i32
    %c0_i32_1 = arith.constant 0 : i32
    return %c0_i32, %c0_i32_0 : i32, i32
  }
  func.func @transform_7(%arg0: i32) -> (i32, i32) {
    %c0_i32 = arith.constant 0 : i32
    %c0_i32_0 = arith.constant 0 : i32
    %c0_i32_1 = arith.constant 0 : i32
    return %c0_i32, %c0_i32_0 : i32, i32
  }
  func.func @transform_8(%arg0: i32) -> (i32, i32) {
    %c0_i32 = arith.constant 0 : i32
    %c0_i32_0 = arith.constant 0 : i32
    %c0_i32_1 = arith.constant 0 : i32
    return %c0_i32, %c0_i32_0 : i32, i32
  }
  func.func @transform_9(%arg0: i32) -> (i32, i32, i32) {
    %c0_i32 = arith.constant 0 : i32
    %c0_i32_0 = arith.constant 0 : i32
    %c0_i32_1 = arith.constant 0 : i32
    return %arg0, %c0_i32, %c0_i32_0 : i32, i32, i32
  }
}

</mosaic_0001>

<llo_original>
// kernel: tpu_custom_call.1
$region0: #{tpu_custom_call.1}
  #allocation0 [shape = 'u32[]', space=smem, size = 0x4, offset = 0x4, fixed_abs, tag = 'smem constant byte address 0x4 - core index']
  #allocation1 [shape = 'u32[144,128]{1,0:T(1,128)}', space=vmem, size = 0x12000, scoped, tag = 'internal scratch']
  %s0 = inlined_call_operand.hbm [shape: f32[2,8,32], index: 0, kind: input, shape index: {}]
  %s1 = inlined_call_operand.hbm [shape: f32[32,32], index: 1, kind: input, shape index: {}]
  %s2 = inlined_call_operand.hbm [shape: f32[32,32], index: 2, kind: input, shape index: {}]
  %s3 = inlined_call_operand.hbm [shape: f32[32,32], index: 3, kind: input, shape index: {}]
  %s4 = inlined_call_operand.vmem [shape: f32[1,32], index: 4, kind: input, shape index: {}]
  %s5 = inlined_call_operand.vmem [shape: f32[1,32], index: 5, kind: input, shape index: {}]
  %s6 = inlined_call_operand.vmem [shape: f32[1,32], index: 6, kind: input, shape index: {}]
  %s7 = inlined_call_operand.hbm [shape: f32[32,32], index: 7, kind: input, shape index: {}]
  %s8 = inlined_call_operand.vmem [shape: f32[1,32], index: 8, kind: input, shape index: {}]
  %s9 = inlined_call_operand.hbm [shape: f32[2,8,32], index: 9, kind: output, shape index: {}]
  %s10 = sld [smem:[#allocation0]]
  $region89: #{tpu_custom_call.1} parent=0
    _
  %s12 = ssub.s32 1, %s10
  %s13 = scalar_select 0, %s12, %s10
  $region1: #{tpu_custom_call.1} parent=0
    #allocation2 [shape = 'u8[8192]{0}', space=vmem, size = 0x2000, scoped, tag = 'input window, operand 0']
    #allocation3 [shape = 's32[2]{0}', space=sflag, size = 0x8, scoped, tag = 'scoped memory for tpu_custom_call.1']
    #allocation4 [shape = 's32[2]{0}', space=sflag, size = 0x8, scoped, tag = 'scoped memory for tpu_custom_call.1']
    #allocation5 [shape = 'u8[16384]{0}', space=vmem, size = 0x4000, scoped, tag = 'input window, operand 1, single buffered']
    #allocation6 [shape = 's32[1]{0}', space=sflag, size = 0x4, scoped, tag = 'scoped memory for tpu_custom_call.1']
    #allocation7 [shape = 'u8[16384]{0}', space=vmem, size = 0x4000, scoped, tag = 'input window, operand 2, single buffered']
    #allocation8 [shape = 'u8[16384]{0}', space=vmem, size = 0x4000, scoped, tag = 'input window, operand 3, single buffered']
    #allocation9 [shape = 's32[1]{0}', space=sflag, size = 0x4, scoped, tag = 'scoped memory for tpu_custom_call.1']
    #allocation10 [shape = 'u8[16384]{0}', space=vmem, size = 0x4000, scoped, tag = 'input window, operand 7, single buffered']
    #allocation11 [shape = 'u8[8192]{0}', space=vmem, size = 0x2000, scoped, tag = 'output window, operand 0']
    %14 = vsyncpa [#allocation3], 0
    %s15 = scalar_lea.sflag [#allocation3], 1
    %16 = vsyncpa %s15, 0
    %17 = vsyncpa [#allocation6], 0
    %18 = vsyncpa [#allocation9], 0
    %19 = vsyncpa [#allocation4], 0
    %s20 = scalar_lea.sflag [#allocation4], 1
    %21 = vsyncpa %s20, 0
    loop: start=0, step=1, limit=4
    $region2: #{tpu_custom_call.1} parent=1 // loop_pre_header
      _
    $region3: #{tpu_custom_call.1} parent=1 // loop_header
      %s23 = sphi 0, %s27
      %p24 = scmp.ge.s32.totalorder %s23, 4
      %s33 = sphi 0, %s35
      %s36 = sphi 0, %s33
      %s37 = sphi 0, %s36
      %s53 = sphi 0, %s37
      %s57 = sphi 0, %s57
      %s59 = sphi 0, %s57
      %s60 = sphi 0, %s59
      %s74 = sphi 0, %s60
      %s78 = sphi 0, %s78
      %s80 = sphi 0, %s78
      %s81 = sphi 0, %s80
      %s95 = sphi 0, %s81
      %s99 = sphi 0, %s99
      %s101 = sphi 0, %s99
      %s102 = sphi 0, %s101
      %s116 = sphi 0, %s102
      %s120 = sphi 0, %s120
      %s122 = sphi 0, %s120
      %s123 = sphi 0, %s122
      %s137 = sphi 0, %s123
      %s141 = sphi 0, %s141
      %s143 = sphi 0, %s141
      %s144 = sphi 0, %s143
      %s158 = sphi 0, %s144
      %s162 = sphi 0, %s162
      %s164 = sphi 0, %s162
      %s165 = sphi 0, %s164
      %s179 = sphi 0, %s165
      %s183 = sphi 0, %s183
      %s185 = sphi 0, %s183
      %s186 = sphi 0, %s185
      %s200 = sphi 0, %s186
      %s204 = sphi 0, %s204
      %s206 = sphi 0, %s204
      %s207 = sphi 0, %s206
      %s221 = sphi 0, %s207
      %s227 = sphi 0, %s229
      %s230 = sphi 0, %s227
      %s231 = sphi 0, %s230
      %s247 = sphi 0, %s231
    $region4: #{tpu_custom_call.1} parent=1 // loop_header_branch
      %26 = sbr.rel (%p24) target = $region8
    $region5: #{tpu_custom_call.1} parent=1 // loop_body
      %s28 = ssub.s32 %s23, 1
      %s29 = ssub.s32 %s23, 2
      %s30 = sadd.s32 %s23, 1
      %s31 = ssub.s32 %s23, %s30
      %p32 = scmp.eq.s32.totalorder %s31, 0
      %s34 = sadd.s32 %s33, 1
      %s35 = scalar_select %p32, %s33, %s34
      %p38 = pneg %p32
      %p39 = scmp.eq.s32.totalorder %s23, 1
      %p40 = por %p38, %p39
      %p41 = scmp.ne.s32.totalorder %s33, %s36
      %p42 = scmp.eq.s32.totalorder %s23, 0
      %p43 = por %p41, %p42
      %p44 = scmp.ne.s32.totalorder %s33, %s36
      %p45 = scmp.eq.s32.totalorder %s28, 1
      %p46 = por %p44, %p45
      %p47 = scmp.ne.s32.totalorder %s36, %s37
      %p48 = scmp.eq.s32.totalorder %s28, 0
      %p49 = por %p47, %p48
      %p50 = scmp.ne.s32.totalorder %s36, %s37
      %p51 = scmp.eq.s32.totalorder %s29, 1
      %p52 = por %p50, %p51
      %p54 = scmp.ne.s32.totalorder %s37, %s53
      %p55 = scmp.eq.s32.totalorder %s29, 0
      %p56 = por %p54, %p55
      %s58 = sadd.s32 %s57, 1
      %p61 = scmp.eq.s32.totalorder %s23, 1
      %p62 = scmp.ne.s32.totalorder %s57, %s59
      %p63 = scmp.eq.s32.totalorder %s23, 0
      %p64 = por %p62, %p63
      %p65 = scmp.ne.s32.totalorder %s57, %s59
      %p66 = scmp.eq.s32.totalorder %s28, 1
      %p67 = por %p65, %p66
      %p68 = scmp.ne.s32.totalorder %s59, %s60
      %p69 = scmp.eq.s32.totalorder %s28, 0
      %p70 = por %p68, %p69
      %p71 = scmp.ne.s32.totalorder %s59, %s60
      %p72 = scmp.eq.s32.totalorder %s29, 1
      %p73 = por %p71, %p72
      %p75 = scmp.ne.s32.totalorder %s60, %s74
      %p76 = scmp.eq.s32.totalorder %s29, 0
      %p77 = por %p75, %p76
      %s79 = sadd.s32 %s78, 1
      %p82 = scmp.eq.s32.totalorder %s23, 1
      %p83 = scmp.ne.s32.totalorder %s78, %s80
      %p84 = scmp.eq.s32.totalorder %s23, 0
      %p85 = por %p83, %p84
      %p86 = scmp.ne.s32.totalorder %s78, %s80
      %p87 = scmp.eq.s32.totalorder %s28, 1
      %p88 = por %p86, %p87
      %p89 = scmp.ne.s32.totalorder %s80, %s81
      %p90 = scmp.eq.s32.totalorder %s28, 0
      %p91 = por %p89, %p90
      %p92 = scmp.ne.s32.totalorder %s80, %s81
      %p93 = scmp.eq.s32.totalorder %s29, 1
      %p94 = por %p92, %p93
      %p96 = scmp.ne.s32.totalorder %s81, %s95
      %p97 = scmp.eq.s32.totalorder %s29, 0
      %p98 = por %p96, %p97
      %s100 = sadd.s32 %s99, 1
      %p103 = scmp.eq.s32.totalorder %s23, 1
      %p104 = scmp.ne.s32.totalorder %s99, %s101
      %p105 = scmp.eq.s32.totalorder %s23, 0
      %p106 = por %p104, %p105
      %p107 = scmp.ne.s32.totalorder %s99, %s101
      %p108 = scmp.eq.s32.totalorder %s28, 1
      %p109 = por %p107, %p108
      %p110 = scmp.ne.s32.totalorder %s101, %s102
      %p111 = scmp.eq.s32.totalorder %s28, 0
      %p112 = por %p110, %p111
      %p113 = scmp.ne.s32.totalorder %s101, %s102
      %p114 = scmp.eq.s32.totalorder %s29, 1
      %p115 = por %p113, %p114
      %p117 = scmp.ne.s32.totalorder %s102, %s116
      %p118 = scmp.eq.s32.totalorder %s29, 0
      %p119 = por %p117, %p118
      %s121 = sadd.s32 %s120, 1
      %p124 = scmp.eq.s32.totalorder %s23, 1
      %p125 = scmp.ne.s32.totalorder %s120, %s122
      %p126 = scmp.eq.s32.totalorder %s23, 0
      %p127 = por %p125, %p126
      %p128 = scmp.ne.s32.totalorder %s120, %s122
      %p129 = scmp.eq.s32.totalorder %s28, 1
      %p130 = por %p128, %p129
      %p131 = scmp.ne.s32.totalorder %s122, %s123
      %p132 = scmp.eq.s32.totalorder %s28, 0
      %p133 = por %p131, %p132
      %p134 = scmp.ne.s32.totalorder %s122, %s123
      %p135 = scmp.eq.s32.totalorder %s29, 1
      %p136 = por %p134, %p135
      %p138 = scmp.ne.s32.totalorder %s123, %s137
      %p139 = scmp.eq.s32.totalorder %s29, 0
      %p140 = por %p138, %p139
      %s142 = sadd.s32 %s141, 1
      %p145 = scmp.eq.s32.totalorder %s23, 1
      %p146 = scmp.ne.s32.totalorder %s141, %s143
      %p147 = scmp.eq.s32.totalorder %s23, 0
      %p148 = por %p146, %p147
      %p149 = scmp.ne.s32.totalorder %s141, %s143
      %p150 = scmp.eq.s32.totalorder %s28, 1
      %p151 = por %p149, %p150
      %p152 = scmp.ne.s32.totalorder %s143, %s144
      %p153 = scmp.eq.s32.totalorder %s28, 0
      %p154 = por %p152, %p153
      %p155 = scmp.ne.s32.totalorder %s143, %s144
      %p156 = scmp.eq.s32.totalorder %s29, 1
      %p157 = por %p155, %p156
      %p159 = scmp.ne.s32.totalorder %s144, %s158
      %p160 = scmp.eq.s32.totalorder %s29, 0
      %p161 = por %p159, %p160
      %s163 = sadd.s32 %s162, 1
      %p166 = scmp.eq.s32.totalorder %s23, 1
      %p167 = scmp.ne.s32.totalorder %s162, %s164
      %p168 = scmp.eq.s32.totalorder %s23, 0
      %p169 = por %p167, %p168
      %p170 = scmp.ne.s32.totalorder %s162, %s164
      %p171 = scmp.eq.s32.totalorder %s28, 1
      %p172 = por %p170, %p171
      %p173 = scmp.ne.s32.totalorder %s164, %s165
      %p174 = scmp.eq.s32.totalorder %s28, 0
      %p175 = por %p173, %p174
      %p176 = scmp.ne.s32.totalorder %s164, %s165
      %p177 = scmp.eq.s32.totalorder %s29, 1
      %p178 = por %p176, %p177
      %p180 = scmp.ne.s32.totalorder %s165, %s179
      %p181 = scmp.eq.s32.totalorder %s29, 0
      %p182 = por %p180, %p181
      %s184 = sadd.s32 %s183, 1
      %p187 = scmp.eq.s32.totalorder %s23, 1
      %p188 = scmp.ne.s32.totalorder %s183, %s185
      %p189 = scmp.eq.s32.totalorder %s23, 0
      %p190 = por %p188, %p189
      %p191 = scmp.ne.s32.totalorder %s183, %s185
      %p192 = scmp.eq.s32.totalorder %s28, 1
      %p193 = por %p191, %p192
      %p194 = scmp.ne.s32.totalorder %s185, %s186
      %p195 = scmp.eq.s32.totalorder %s28, 0
      %p196 = por %p194, %p195
      %p197 = scmp.ne.s32.totalorder %s185, %s186
      %p198 = scmp.eq.s32.totalorder %s29, 1
      %p199 = por %p197, %p198
      %p201 = scmp.ne.s32.totalorder %s186, %s200
      %p202 = scmp.eq.s32.totalorder %s29, 0
      %p203 = por %p201, %p202
      %s205 = sadd.s32 %s204, 1
      %p208 = scmp.eq.s32.totalorder %s23, 1
      %p209 = scmp.ne.s32.totalorder %s204, %s206
      %p210 = scmp.eq.s32.totalorder %s23, 0
      %p211 = por %p209, %p210
      %p212 = scmp.ne.s32.totalorder %s204, %s206
      %p213 = scmp.eq.s32.totalorder %s28, 1
      %p214 = por %p212, %p213
      %p215 = scmp.ne.s32.totalorder %s206, %s207
      %p216 = scmp.eq.s32.totalorder %s28, 0
      %p217 = por %p215, %p216
      %p218 = scmp.ne.s32.totalorder %s206, %s207
      %p219 = scmp.eq.s32.totalorder %s29, 1
      %p220 = por %p218, %p219
      %p222 = scmp.ne.s32.totalorder %s207, %s221
      %p223 = scmp.eq.s32.totalorder %s29, 0
      %p224 = por %p222, %p223
      %s225 = ssub.s32 %s23, %s30
      %p226 = scmp.eq.s32.totalorder %s225, 0
      %s228 = sadd.s32 %s227, 1
      %s229 = scalar_select %p226, %s227, %s228
      %p232 = pneg %p226
      %p233 = scmp.eq.s32.totalorder %s23, 1
      %p234 = por %p232, %p233
      %p235 = scmp.ne.s32.totalorder %s227, %s230
      %p236 = scmp.eq.s32.totalorder %s23, 0
      %p237 = por %p235, %p236
      %p238 = scmp.ne.s32.totalorder %s227, %s230
      %p239 = scmp.eq.s32.totalorder %s28, 1
      %p240 = por %p238, %p239
      %p241 = scmp.ne.s32.totalorder %s230, %s231
      %p242 = scmp.eq.s32.totalorder %s28, 0
      %p243 = por %p241, %p242
      %p244 = scmp.ne.s32.totalorder %s230, %s231
      %p245 = scmp.eq.s32.totalorder %s29, 1
      %p246 = por %p244, %p245
      %p248 = scmp.ne.s32.totalorder %s231, %s247
      %p249 = scmp.eq.s32.totalorder %s29, 0
      %p250 = por %p248, %p249
      %p251 = scmp.le.s32.totalorder 1, %s23
      %p252 = scmp.lt.s32.totalorder %s23, 3
      %p253 = pnand %p251, %p252
      %p254 = pneg %p253
      // Predicated region
      $region9: #{tpu_custom_call.1} parent=5 // pred_check
        _
      $region10: #{tpu_custom_call.1} parent=5 // pred_check_branch
        %256 = sbr.rel (%p253) target = $region12
      $region11: #{tpu_custom_call.1} parent=5 // pred_region
        %s257 = ssub.s32 %s23, 1
        // Predicated region
        $region13: #{tpu_custom_call.1} parent=11 // pred_check
          %p258 = pneg %p70
        $region14: #{tpu_custom_call.1} parent=11 // pred_check_branch
          %260 = sbr.rel (%p258) target = $region16
        $region15: #{tpu_custom_call.1} parent=11 // pred_region
          %s262 = ssub.s32 512, 512
          %263 = vsyncadd [#allocation6], %s262
          %s264 = sshll.u32 [#allocation5], 4
          %s265 = int_to_ptr.vmem [resolvable:$true] %s264
          %270 = dma.hbm_to_vmem [thread:$0]  %s1, 512, %s265, [#allocation6], 128, 128, 8
        $region16: #{tpu_custom_call.1} parent=11 // pred_fallthru
          _
        // Predicated region
        $region17: #{tpu_custom_call.1} parent=11 // pred_check
          %p271 = pneg %p91
        $region18: #{tpu_custom_call.1} parent=11 // pred_check_branch
          %273 = sbr.rel (%p271) target = $region20
        $region19: #{tpu_custom_call.1} parent=11 // pred_region
          %s275 = ssub.s32 512, 512
          %276 = vsyncadd [#allocation6], %s275
          %s277 = sshll.u32 [#allocation7], 4
          %s278 = int_to_ptr.vmem [resolvable:$true] %s277
          %283 = dma.hbm_to_vmem [thread:$0]  %s2, 512, %s278, [#allocation6], 128, 128, 8
        $region20: #{tpu_custom_call.1} parent=11 // pred_fallthru
          _
        // Predicated region
        $region21: #{tpu_custom_call.1} parent=11 // pred_check
          %p284 = pneg %p112
        $region22: #{tpu_custom_call.1} parent=11 // pred_check_branch
          %286 = sbr.rel (%p284) target = $region24
        $region23: #{tpu_custom_call.1} parent=11 // pred_region
          %s288 = ssub.s32 512, 512
          %289 = vsyncadd [#allocation9], %s288
          %s290 = sshll.u32 [#allocation8], 4
          %s291 = int_to_ptr.vmem [resolvable:$true] %s290
          %296 = dma.hbm_to_vmem [thread:$0]  %s3, 512, %s291, [#allocation9], 128, 128, 8
        $region24: #{tpu_custom_call.1} parent=11 // pred_fallthru
          _
        // Predicated region
        $region25: #{tpu_custom_call.1} parent=11 // pred_check
          %p297 = pneg %p133
        $region26: #{tpu_custom_call.1} parent=11 // pred_check_branch
          %299 = sbr.rel (%p297) target = $region28
        $region27: #{tpu_custom_call.1} parent=11 // pred_region
          _
        $region28: #{tpu_custom_call.1} parent=11 // pred_fallthru
          _
        // Predicated region
        $region29: #{tpu_custom_call.1} parent=11 // pred_check
          %p300 = pneg %p154
        $region30: #{tpu_custom_call.1} parent=11 // pred_check_branch
          %302 = sbr.rel (%p300) target = $region32
        $region31: #{tpu_custom_call.1} parent=11 // pred_region
          _
        $region32: #{tpu_custom_call.1} parent=11 // pred_fallthru
          _
        // Predicated region
        $region33: #{tpu_custom_call.1} parent=11 // pred_check
          %p303 = pneg %p175
        $region34: #{tpu_custom_call.1} parent=11 // pred_check_branch
          %305 = sbr.rel (%p303) target = $region36
        $region35: #{tpu_custom_call.1} parent=11 // pred_region
          _
        $region36: #{tpu_custom_call.1} parent=11 // pred_fallthru
          _
        // Predicated region
        $region37: #{tpu_custom_call.1} parent=11 // pred_check
          %p306 = pneg %p196
        $region38: #{tpu_custom_call.1} parent=11 // pred_check_branch
          %308 = sbr.rel (%p306) target = $region40
        $region39: #{tpu_custom_call.1} parent=11 // pred_region
          %s310 = ssub.s32 512, 512
          %311 = vsyncadd [#allocation9], %s310
          %s312 = sshll.u32 [#allocation10], 4
          %s313 = int_to_ptr.vmem [resolvable:$true] %s312
          %318 = dma.hbm_to_vmem [thread:$0]  %s7, 512, %s313, [#allocation9], 128, 128, 8
        $region40: #{tpu_custom_call.1} parent=11 // pred_fallthru
          _
        // Predicated region
        $region41: #{tpu_custom_call.1} parent=11 // pred_check
          %p319 = pneg %p217
        $region42: #{tpu_custom_call.1} parent=11 // pred_check_branch
          %321 = sbr.rel (%p319) target = $region44
        $region43: #{tpu_custom_call.1} parent=11 // pred_region
          _
        $region44: #{tpu_custom_call.1} parent=11 // pred_fallthru
          _
      $region12: #{tpu_custom_call.1} parent=5 // pred_fallthru
        _
      %p322 = scmp.lt.s32.totalorder %s23, 2
      // Predicated region
      $region45: #{tpu_custom_call.1} parent=5 // pred_check
        %p323 = pneg %p322
      $region46: #{tpu_custom_call.1} parent=5 // pred_check_branch
        %325 = sbr.rel (%p323) target = $region48
      $region47: #{tpu_custom_call.1} parent=5 // pred_region
        // Predicated region
        $region49: #{tpu_custom_call.1} parent=47 // pred_check
          %p326 = pneg %p43
        $region50: #{tpu_custom_call.1} parent=47 // pred_check_branch
          %328 = sbr.rel (%p326) target = $region52
        $region51: #{tpu_custom_call.1} parent=47 // pred_region
          %s329 = sand.u32 %s33, 1
          %s330 = scalar_lea.sflag [#allocation3], %s329
          %s331 = sand.u32 %s33, 1
          %s332 = smul.addr %s331, 8
          %s333 = scalar_lea.vmem [#allocation2], %s332
          %s335 = ssub.s32 128, 128
          %336 = vsyncadd %s330, %s335
          %s337 = smul.addr %s23, 128
          %s338 = scalar_lea.hbm %s0, %s337
          %s340 = sshll.u32 %s333, 4
          %s341 = int_to_ptr.vmem [resolvable:$true] %s340
          %343 = dma.hbm_to_vmem [thread:$0]  %s338, 128, %s341, %s330
        $region52: #{tpu_custom_call.1} parent=47 // pred_fallthru
          _
      $region48: #{tpu_custom_call.1} parent=5 // pred_fallthru
        _
      %p344 = scmp.le.s32.totalorder 1, %s23
      %p345 = scmp.lt.s32.totalorder %s23, 3
      %p346 = pnand %p344, %p345
      %p347 = pneg %p346
      // Predicated region
      $region53: #{tpu_custom_call.1} parent=5 // pred_check
        _
      $region54: #{tpu_custom_call.1} parent=5 // pred_check_branch
        %349 = sbr.rel (%p346) target = $region56
      $region55: #{tpu_custom_call.1} parent=5 // pred_region
        %s350 = ssub.s32 %s23, 1
        %s351 = sand.u32 %s36, 1
        %s352 = scalar_lea.sflag [#allocation3], %s351
        %s353 = sand.u32 %s36, 1
        %s354 = smul.addr %s353, 8
        %s355 = scalar_lea.vmem [#allocation2], %s354
        // Predicated region
        $region57: #{tpu_custom_call.1} parent=55 // pred_check
          %p356 = pneg %p49
        $region58: #{tpu_custom_call.1} parent=55 // pred_check_branch
          %358 = sbr.rel (%p356) target = $region60
        $region59: #{tpu_custom_call.1} parent=55 // pred_region
          %359 = dma.done %s352, 128
        $region60: #{tpu_custom_call.1} parent=55 // pred_fallthru
          _
        // Predicated region
        $region61: #{tpu_custom_call.1} parent=55 // pred_check
          %p360 = pneg %p70
        $region62: #{tpu_custom_call.1} parent=55 // pred_check_branch
          %362 = sbr.rel (%p360) target = $region64
        $region63: #{tpu_custom_call.1} parent=55 // pred_region
          %363 = dma.done [#allocation6], 512
        $region64: #{tpu_custom_call.1} parent=55 // pred_fallthru
          _
        // Predicated region
        $region65: #{tpu_custom_call.1} parent=55 // pred_check
          %p364 = pneg %p91
        $region66: #{tpu_custom_call.1} parent=55 // pred_check_branch
          %366 = sbr.rel (%p364) target = $region68
        $region67: #{tpu_custom_call.1} parent=55 // pred_region
          %367 = dma.done [#allocation6], 512
        $region68: #{tpu_custom_call.1} parent=55 // pred_fallthru
          _
        // Predicated region
        $region69: #{tpu_custom_call.1} parent=55 // pred_check
          %p368 = pneg %p112
        $region70: #{tpu_custom_call.1} parent=55 // pred_check_branch
          %370 = sbr.rel (%p368) target = $region72
        $region71: #{tpu_custom_call.1} parent=55 // pred_region
          %371 = dma.done [#allocation9], 512
        $region72: #{tpu_custom_call.1} parent=55 // pred_fallthru
          _
        // Predicated region
        $region73: #{tpu_custom_call.1} parent=55 // pred_check
          %p372 = pneg %p196
        $region74: #{tpu_custom_call.1} parent=55 // pred_check_branch
          %374 = sbr.rel (%p372) target = $region76
        $region75: #{tpu_custom_call.1} parent=55 // pred_region
          %375 = dma.done [#allocation9], 512
        $region76: #{tpu_custom_call.1} parent=55 // pred_fallthru
          _
        %s376 = sand.u32 %s36, 1
        %s377 = scalar_lea.sflag [#allocation3], %s376
        %s378 = sand.u32 %s36, 1
        %s379 = smul.addr %s378, 8
        %s380 = scalar_lea.vmem [#allocation2], %s379
        %p381 = pneg %p49
        %p382 = pneg %p46
        %p383 = pneg %p70
        %p384 = pneg %p67
        %p385 = pneg %p91
        %p386 = pneg %p88
        %p387 = pneg %p112
        %p388 = pneg %p109
        %p389 = pneg %p133
        %p390 = pneg %p130
        %p391 = pneg %p154
        %p392 = pneg %p151
        %p393 = pneg %p175
        %p394 = pneg %p172
        %p395 = pneg %p196
        %p396 = pneg %p193
        %p397 = pneg %p217
        %p398 = pneg %p214
        %p399 = pneg %p243
        %p400 = pneg %p240
        %s401 = sand.u32 %s230, 1
        %s402 = scalar_lea.sflag [#allocation4], %s401
        %s403 = sand.u32 %s230, 1
        %s404 = smul.addr %s403, 8
        %s405 = scalar_lea.vmem [#allocation11], %s404
        %v406 = vld [vmem:[%s355] sm:$0xff]
        %v407 = vld [vmem:[#allocation5] sm:$0xff]
        %v408 = vld [vmem:[#allocation5 + $0x8] sm:$0xff]
        %v409 = vld [vmem:[#allocation5 + $0x10] sm:$0xff]
        %v410 = vld [vmem:[#allocation5 + $0x18] sm:$0xff]
        %v411 = vld [vmem:[%s4] sm:$0x1]
        %v413 = vlaneseq
        %v414 = vshrl.u32 %v413, 7
        %v415 = vsub.s32 0, %v414
        %v416 = vrot.slane %v411, %v415
        %vm418 = vcmask 261120
        %v420 = vsel %vm418, %v406, 0
        %422 = vmatprep.subr.mxu0 0.0
        %423 = vmatpush1.msra.mxu0 %v407
        %424 = vmatprep.subr.mxu0 0.0
        %425 = vmatpush1.msra.mxu0 %v408
        %426 = vmatprep.subr.mxu0 0.0
        %427 = vmatpush1.msra.mxu0 %v409
        %428 = vmatprep.subr.mxu0 0.0
        %429 = vmatpush1.msra.mxu0 %v410
        %430 = vmatprep.subr.mxu0 0.0
        %431 = vmatpush1.msra.mxu0 0.0
        %432 = vmatprep.subr.mxu0 0.0
        %433 = vmatpush1.msra.mxu0 0.0
        %434 = vmatprep.subr.mxu0 0.0
        %435 = vmatpush1.msra.mxu0 0.0
        %436 = vmatprep.subr.mxu0 0.0
        %437 = vmatpush1.msra.mxu0 0.0
        %438 = vmatprep.subr.mxu0 0.0
        %439 = vmatpush1.msra.mxu0 0.0
        %440 = vmatprep.subr.mxu0 0.0
        %441 = vmatpush1.msra.mxu0 0.0
        %442 = vmatprep.subr.mxu0 0.0
        %443 = vmatpush1.msra.mxu0 0.0
        %444 = vmatprep.subr.mxu0 0.0
        %445 = vmatpush1.msra.mxu0 0.0
        %446 = vmatprep.subr.mxu0 0.0
        %447 = vmatpush1.msra.mxu0 0.0
        %448 = vmatprep.subr.mxu0 0.0
        %449 = vmatpush1.msra.mxu0 0.0
        %450 = vmatprep.subr.mxu0 0.0
        %451 = vmatpush1.msra.mxu0 0.0
        %452 = vmatprep.subr.mxu0 0.0
        %453 = vmatpush1.msra.mxu0 0.0
        %454 = vmatprep.subr.mxu0 0.0
        %455 = vmatpush1.msra.mxu0 0.0
        %456 = vmatprep.subr.mxu0 0.0
        %457 = vmatpush1.msra.mxu0 0.0
        %458 = vmatprep.subr.mxu0 0.0
        %459 = vmatpush1.msra.mxu0 0.0
        %460 = vmatprep.subr.mxu0 0.0
        %461 = vmatpush1.msra.mxu0 0.0
        %462 = vmatprep.subr.mxu0 0.0
        %463 = vmatpush1.msra.mxu0 0.0
        %464 = vmatprep.subr.mxu0 0.0
        %465 = vmatpush1.msra.mxu0 0.0
        %466 = vmatprep.subr.mxu0 0.0
        %467 = vmatpush1.msra.mxu0 0.0
        %468 = vmatprep.subr.mxu0 0.0
        %469 = vmatpush1.msra.mxu0 0.0
        %470 = vmatprep.subr.mxu0 0.0
        %471 = vmatpush1.msra.mxu0 0.0
        %472 = vmatprep.subr.mxu0 0.0
        %473 = vmatpush1.msra.mxu0 0.0
        %474 = vmatprep.subr.mxu0 0.0
        %475 = vmatpush1.msra.mxu0 0.0
        %476 = vmatprep.subr.mxu0 0.0
        %477 = vmatpush1.msra.mxu0 0.0
        %478 = vmatprep.subr.mxu0 0.0
        %479 = vmatpush1.msra.mxu0 0.0
        %480 = vmatprep.subr.mxu0 0.0
        %481 = vmatpush1.msra.mxu0 0.0
        %482 = vmatprep.subr.mxu0 0.0
        %483 = vmatpush1.msra.mxu0 0.0
        %484 = vmatprep.subr.mxu0 0.0
        %485 = vmatpush1.msra.mxu0 0.0
        %486 = vmatprep.mubr.f32.mxu0 0.0
        %487 = vmatmul.mubr.f32.gmra.mrb[0].mxu0 %v420
        %v488 = vpop.f32.mrb[0].mxu0
        %v489 = vadd.f32 %v416, %v488
        %v490 = vpop.f32.mrb[0].mxu0
        %491 = vdwg.mxu0
        %v492 = vld [vmem:[#allocation7] sm:$0xff]
        %v493 = vld [vmem:[#allocation7 + $0x8] sm:$0xff]
        %v494 = vld [vmem:[#allocation7 + $0x10] sm:$0xff]
        %v495 = vld [vmem:[#allocation7 + $0x18] sm:$0xff]
        %v496 = vld [vmem:[%s5] sm:$0x1]
        %v498 = vlaneseq
        %v499 = vshrl.u32 %v498, 7
        %v500 = vsub.s32 0, %v499
        %v501 = vrot.slane %v496, %v500
        %503 = vmatprep.subr.mxu0 0.0
        %504 = vmatpush1.msra.mxu0 %v492
        %505 = vmatprep.subr.mxu0 0.0
        %506 = vmatpush1.msra.mxu0 %v493
        %507 = vmatprep.subr.mxu0 0.0
        %508 = vmatpush1.msra.mxu0 %v494
        %509 = vmatprep.subr.mxu0 0.0
        %510 = vmatpush1.msra.mxu0 %v495
        %511 = vmatprep.subr.mxu0 0.0
        %512 = vmatpush1.msra.mxu0 0.0
        %513 = vmatprep.subr.mxu0 0.0
        %514 = vmatpush1.msra.mxu0 0.0
        %515 = vmatprep.subr.mxu0 0.0
        %516 = vmatpush1.msra.mxu0 0.0
        %517 = vmatprep.subr.mxu0 0.0
        %518 = vmatpush1.msra.mxu0 0.0
        %519 = vmatprep.subr.mxu0 0.0
        %520 = vmatpush1.msra.mxu0 0.0
        %521 = vmatprep.subr.mxu0 0.0
        %522 = vmatpush1.msra.mxu0 0.0
        %523 = vmatprep.subr.mxu0 0.0
        %524 = vmatpush1.msra.mxu0 0.0
        %525 = vmatprep.subr.mxu0 0.0
        %526 = vmatpush1.msra.mxu0 0.0
        %527 = vmatprep.subr.mxu0 0.0
        %528 = vmatpush1.msra.mxu0 0.0
        %529 = vmatprep.subr.mxu0 0.0
        %530 = vmatpush1.msra.mxu0 0.0
        %531 = vmatprep.subr.mxu0 0.0
        %532 = vmatpush1.msra.mxu0 0.0
        %533 = vmatprep.subr.mxu0 0.0
        %534 = vmatpush1.msra.mxu0 0.0
        %535 = vmatprep.subr.mxu0 0.0
        %536 = vmatpush1.msra.mxu0 0.0
        %537 = vmatprep.subr.mxu0 0.0
        %538 = vmatpush1.msra.mxu0 0.0
        %539 = vmatprep.subr.mxu0 0.0
        %540 = vmatpush1.msra.mxu0 0.0
        %541 = vmatprep.subr.mxu0 0.0
        %542 = vmatpush1.msra.mxu0 0.0
        %543 = vmatprep.subr.mxu0 0.0
        %544 = vmatpush1.msra.mxu0 0.0
        %545 = vmatprep.subr.mxu0 0.0
        %546 = vmatpush1.msra.mxu0 0.0
        %547 = vmatprep.subr.mxu0 0.0
        %548 = vmatpush1.msra.mxu0 0.0
        %549 = vmatprep.subr.mxu0 0.0
        %550 = vmatpush1.msra.mxu0 0.0
        %551 = vmatprep.subr.mxu0 0.0
        %552 = vmatpush1.msra.mxu0 0.0
        %553 = vmatprep.subr.mxu0 0.0
        %554 = vmatpush1.msra.mxu0 0.0
        %555 = vmatprep.subr.mxu0 0.0
        %556 = vmatpush1.msra.mxu0 0.0
        %557 = vmatprep.subr.mxu0 0.0
        %558 = vmatpush1.msra.mxu0 0.0
        %559 = vmatprep.subr.mxu0 0.0
        %560 = vmatpush1.msra.mxu0 0.0
        %561 = vmatprep.subr.mxu0 0.0
        %562 = vmatpush1.msra.mxu0 0.0
        %563 = vmatprep.subr.mxu0 0.0
        %564 = vmatpush1.msra.mxu0 0.0
        %565 = vmatprep.subr.mxu0 0.0
        %566 = vmatpush1.msra.mxu0 0.0
        %567 = vmatprep.mubr.f32.mxu0 0.0
        %568 = vmatmul.mubr.f32.gmra.mrb[0].mxu0 %v420
        %v569 = vpop.f32.mrb[0].mxu0
        %v570 = vadd.f32 %v501, %v569
        %v571 = vpop.f32.mrb[0].mxu0
        %572 = vdwg.mxu0
        %v573 = vld [vmem:[#allocation8] sm:$0xff]
        %v574 = vld [vmem:[#allocation8 + $0x8] sm:$0xff]
        %v575 = vld [vmem:[#allocation8 + $0x10] sm:$0xff]
        %v576 = vld [vmem:[#allocation8 + $0x18] sm:$0xff]
        %v577 = vld [vmem:[%s6] sm:$0x1]
        %v579 = vlaneseq
        %v580 = vshrl.u32 %v579, 7
        %v581 = vsub.s32 0, %v580
        %v582 = vrot.slane %v577, %v581
        %584 = vmatprep.subr.mxu0 0.0
        %585 = vmatpush1.msra.mxu0 %v573
        %586 = vmatprep.subr.mxu0 0.0
        %587 = vmatpush1.msra.mxu0 %v574
        %588 = vmatprep.subr.mxu0 0.0
        %589 = vmatpush1.msra.mxu0 %v575
        %590 = vmatprep.subr.mxu0 0.0
        %591 = vmatpush1.msra.mxu0 %v576
        %592 = vmatprep.subr.mxu0 0.0
        %593 = vmatpush1.msra.mxu0 0.0
        %594 = vmatprep.subr.mxu0 0.0
        %595 = vmatpush1.msra.mxu0 0.0
        %596 = vmatprep.subr.mxu0 0.0
        %597 = vmatpush1.msra.mxu0 0.0
        %598 = vmatprep.subr.mxu0 0.0
        %599 = vmatpush1.msra.mxu0 0.0
        %600 = vmatprep.subr.mxu0 0.0
        %601 = vmatpush1.msra.mxu0 0.0
        %602 = vmatprep.subr.mxu0 0.0
        %603 = vmatpush1.msra.mxu0 0.0
        %604 = vmatprep.subr.mxu0 0.0
        %605 = vmatpush1.msra.mxu0 0.0
        %606 = vmatprep.subr.mxu0 0.0
        %607 = vmatpush1.msra.mxu0 0.0
        %608 = vmatprep.subr.mxu0 0.0
        %609 = vmatpush1.msra.mxu0 0.0
        %610 = vmatprep.subr.mxu0 0.0
        %611 = vmatpush1.msra.mxu0 0.0
        %612 = vmatprep.subr.mxu0 0.0
        %613 = vmatpush1.msra.mxu0 0.0
        %614 = vmatprep.subr.mxu0 0.0
        %615 = vmatpush1.msra.mxu0 0.0
        %616 = vmatprep.subr.mxu0 0.0
        %617 = vmatpush1.msra.mxu0 0.0
        %618 = vmatprep.subr.mxu0 0.0
        %619 = vmatpush1.msra.mxu0 0.0
        %620 = vmatprep.subr.mxu0 0.0
        %621 = vmatpush1.msra.mxu0 0.0
        %622 = vmatprep.subr.mxu0 0.0
        %623 = vmatpush1.msra.mxu0 0.0
        %624 = vmatprep.subr.mxu0 0.0
        %625 = vmatpush1.msra.mxu0 0.0
        %626 = vmatprep.subr.mxu0 0.0
        %627 = vmatpush1.msra.mxu0 0.0
        %628 = vmatprep.subr.mxu0 0.0
        %629 = vmatpush1.msra.mxu0 0.0
        %630 = vmatprep.subr.mxu0 0.0
        %631 = vmatpush1.msra.mxu0 0.0
        %632 = vmatprep.subr.mxu0 0.0
        %633 = vmatpush1.msra.mxu0 0.0
        %634 = vmatprep.subr.mxu0 0.0
        %635 = vmatpush1.msra.mxu0 0.0
        %636 = vmatprep.subr.mxu0 0.0
        %637 = vmatpush1.msra.mxu0 0.0
        %638 = vmatprep.subr.mxu0 0.0
        %639 = vmatpush1.msra.mxu0 0.0
        %640 = vmatprep.subr.mxu0 0.0
        %641 = vmatpush1.msra.mxu0 0.0
        %642 = vmatprep.subr.mxu0 0.0
        %643 = vmatpush1.msra.mxu0 0.0
        %644 = vmatprep.subr.mxu0 0.0
        %645 = vmatpush1.msra.mxu0 0.0
        %646 = vmatprep.subr.mxu0 0.0
        %647 = vmatpush1.msra.mxu0 0.0
        %648 = vmatprep.mubr.f32.mxu0 0.0
        %649 = vmatmul.mubr.f32.gmra.mrb[0].mxu0 %v420
        %v650 = vpop.f32.mrb[0].mxu0
        %v651 = vadd.f32 %v582, %v650
        %v652 = vpop.f32.mrb[0].mxu0
        %653 = vdwg.mxu0
        %v654 = vmul.f32 %v489, 0.35355338
        %656 = vrot.lane.b32.xlu0 %v654, 120
        %v657 = vpop.permute.xlu0 %656
        %658 = vrot.lane.b32.xlu0 %v654, 112
        %v659 = vpop.permute.xlu0 %658
        %660 = vrot.lane.b32.xlu0 %v654, 104
        %v661 = vpop.permute.xlu0 %660
        %663 = vrot.lane.b32.xlu0 %v570, 120
        %v664 = vpop.permute.xlu0 %663
        %666 = vrot.lane.b32.xlu0 %v570, 112
        %v667 = vpop.permute.xlu0 %666
        %669 = vrot.lane.b32.xlu0 %v570, 104
        %v670 = vpop.permute.xlu0 %669
        %673 = vrot.lane.b32.xlu0 %v651, 120
        %v674 = vpop.permute.xlu0 %673
        %676 = vrot.lane.b32.xlu0 %v651, 112
        %v677 = vpop.permute.xlu0 %676
        %679 = vrot.lane.b32.xlu0 %v651, 104
        %v680 = vpop.permute.xlu0 %679
        %682 = vxpose.xlu0.b32.start [1/16] %v570, 128
        %683 = vxpose.xlu0.b32.cont [2/16] 0.0, 128
        %684 = vxpose.xlu0.b32.cont [3/16] 0.0, 128
        %685 = vxpose.xlu0.b32.cont [4/16] 0.0, 128
        %686 = vxpose.xlu0.b32.cont [5/16] 0.0, 128
        %687 = vxpose.xlu0.b32.cont [6/16] 0.0, 128
        %688 = vxpose.xlu0.b32.cont [7/16] 0.0, 128
        %689 = vxpose.xlu0.b32.cont [8/16] 0.0, 128
        %690 = vxpose.xlu0.b32.cont [9/16] 0.0, 128
        %691 = vxpose.xlu0.b32.cont [10/16] 0.0, 128
        %692 = vxpose.xlu0.b32.cont [11/16] 0.0, 128
        %693 = vxpose.xlu0.b32.cont [12/16] 0.0, 128
        %694 = vxpose.xlu0.b32.cont [13/16] 0.0, 128
        %695 = vxpose.xlu0.b32.cont [14/16] 0.0, 128
        %696 = vxpose.xlu0.b32.cont [15/16] 0.0, 128
        %697 = vxpose.xlu0.b32.end [16/16] 0.0, 128
        %v698 = vpop.trf.xlu0
        %v699 = vpop.trf.xlu0
        %v700 = vpop.trf.xlu0
        %v701 = vpop.trf.xlu0
        %v702 = vpop.trf.xlu0
        %v703 = vpop.trf.xlu0
        %v704 = vpop.trf.xlu0
        %v705 = vpop.trf.xlu0
        %v706 = vpop.trf.xlu0
        %v707 = vpop.trf.xlu0
        %v708 = vpop.trf.xlu0
        %v709 = vpop.trf.xlu0
        %v710 = vpop.trf.xlu0
        %v711 = vpop.trf.xlu0
        %v712 = vpop.trf.xlu0
        %v713 = vpop.trf.xlu0
        %714 = vxpose.xlu0.b32.start [1/16] %v664, 128
        %715 = vxpose.xlu0.b32.cont [2/16] 0.0, 128
        %716 = vxpose.xlu0.b32.cont [3/16] 0.0, 128
        %717 = vxpose.xlu0.b32.cont [4/16] 0.0, 128
        %718 = vxpose.xlu0.b32.cont [5/16] 0.0, 128
        %719 = vxpose.xlu0.b32.cont [6/16] 0.0, 128
        %720 = vxpose.xlu0.b32.cont [7/16] 0.0, 128
        %721 = vxpose.xlu0.b32.cont [8/16] 0.0, 128
        %722 = vxpose.xlu0.b32.cont [9/16] 0.0, 128
        %723 = vxpose.xlu0.b32.cont [10/16] 0.0, 128
        %724 = vxpose.xlu0.b32.cont [11/16] 0.0, 128
        %725 = vxpose.xlu0.b32.cont [12/16] 0.0, 128
        %726 = vxpose.xlu0.b32.cont [13/16] 0.0, 128
        %727 = vxpose.xlu0.b32.cont [14/16] 0.0, 128
        %728 = vxpose.xlu0.b32.cont [15/16] 0.0, 128
        %729 = vxpose.xlu0.b32.end [16/16] 0.0, 128
        %v730 = vpop.trf.xlu0
        %v731 = vpop.trf.xlu0
        %v732 = vpop.trf.xlu0
        %v733 = vpop.trf.xlu0
        %v734 = vpop.trf.xlu0
        %v735 = vpop.trf.xlu0
        %v736 = vpop.trf.xlu0
        %v737 = vpop.trf.xlu0
        %v738 = vpop.trf.xlu0
        %v739 = vpop.trf.xlu0
        %v740 = vpop.trf.xlu0
        %v741 = vpop.trf.xlu0
        %v742 = vpop.trf.xlu0
        %v743 = vpop.trf.xlu0
        %v744 = vpop.trf.xlu0
        %v745 = vpop.trf.xlu0
        %746 = vxpose.xlu0.b32.start [1/16] %v667, 128
        %747 = vxpose.xlu0.b32.cont [2/16] 0.0, 128
        %748 = vxpose.xlu0.b32.cont [3/16] 0.0, 128
        %749 = vxpose.xlu0.b32.cont [4/16] 0.0, 128
        %750 = vxpose.xlu0.b32.cont [5/16] 0.0, 128
        %751 = vxpose.xlu0.b32.cont [6/16] 0.0, 128
        %752 = vxpose.xlu0.b32.cont [7/16] 0.0, 128
        %753 = vxpose.xlu0.b32.cont [8/16] 0.0, 128
        %754 = vxpose.xlu0.b32.cont [9/16] 0.0, 128
        %755 = vxpose.xlu0.b32.cont [10/16] 0.0, 128
        %756 = vxpose.xlu0.b32.cont [11/16] 0.0, 128
        %757 = vxpose.xlu0.b32.cont [12/16] 0.0, 128
        %758 = vxpose.xlu0.b32.cont [13/16] 0.0, 128
        %759 = vxpose.xlu0.b32.cont [14/16] 0.0, 128
        %760 = vxpose.xlu0.b32.cont [15/16] 0.0, 128
        %761 = vxpose.xlu0.b32.end [16/16] 0.0, 128
        %v762 = vpop.trf.xlu0
        %v763 = vpop.trf.xlu0
        %v764 = vpop.trf.xlu0
        %v765 = vpop.trf.xlu0
        %v766 = vpop.trf.xlu0
        %v767 = vpop.trf.xlu0
        %v768 = vpop.trf.xlu0
        %v769 = vpop.trf.xlu0
        %v770 = vpop.trf.xlu0
        %v771 = vpop.trf.xlu0
        %v772 = vpop.trf.xlu0
        %v773 = vpop.trf.xlu0
        %v774 = vpop.trf.xlu0
        %v775 = vpop.trf.xlu0
        %v776 = vpop.trf.xlu0
        %v777 = vpop.trf.xlu0
        %778 = vxpose.xlu0.b32.start [1/16] %v670, 128
        %779 = vxpose.xlu0.b32.cont [2/16] 0.0, 128
        %780 = vxpose.xlu0.b32.cont [3/16] 0.0, 128
        %781 = vxpose.xlu0.b32.cont [4/16] 0.0, 128
        %782 = vxpose.xlu0.b32.cont [5/16] 0.0, 128
        %783 = vxpose.xlu0.b32.cont [6/16] 0.0, 128
        %784 = vxpose.xlu0.b32.cont [7/16] 0.0, 128
        %785 = vxpose.xlu0.b32.cont [8/16] 0.0, 128
        %786 = vxpose.xlu0.b32.cont [9/16] 0.0, 128
        %787 = vxpose.xlu0.b32.cont [10/16] 0.0, 128
        %788 = vxpose.xlu0.b32.cont [11/16] 0.0, 128
        %789 = vxpose.xlu0.b32.cont [12/16] 0.0, 128
        %790 = vxpose.xlu0.b32.cont [13/16] 0.0, 128
        %791 = vxpose.xlu0.b32.cont [14/16] 0.0, 128
        %792 = vxpose.xlu0.b32.cont [15/16] 0.0, 128
        %793 = vxpose.xlu0.b32.end [16/16] 0.0, 128
        %v794 = vpop.trf.xlu0
        %v795 = vpop.trf.xlu0
        %v796 = vpop.trf.xlu0
        %v797 = vpop.trf.xlu0
        %v798 = vpop.trf.xlu0
        %v799 = vpop.trf.xlu0
        %v800 = vpop.trf.xlu0
        %v801 = vpop.trf.xlu0
        %v802 = vpop.trf.xlu0
        %v803 = vpop.trf.xlu0
        %v804 = vpop.trf.xlu0
        %v805 = vpop.trf.xlu0
        %v806 = vpop.trf.xlu0
        %v807 = vpop.trf.xlu0
        %v808 = vpop.trf.xlu0
        %v809 = vpop.trf.xlu0
        %vm810 = vcmask 64512
        %v811 = vsel %vm810, %v654, 0
        %813 = vmatprep.subr.mxu0 0.0
        %814 = vmatpush1.msra.mxu0 %v698
        %815 = vmatprep.subr.mxu0 0.0
        %816 = vmatpush1.msra.mxu0 0.0
        %817 = vmatprep.subr.mxu0 0.0
        %818 = vmatpush1.msra.mxu0 0.0
        %819 = vmatprep.subr.mxu0 0.0
        %820 = vmatpush1.msra.mxu0 0.0
        %821 = vmatprep.subr.mxu0 0.0
        %822 = vmatpush1.msra.mxu0 0.0
        %823 = vmatprep.subr.mxu0 0.0
        %824 = vmatpush1.msra.mxu0 0.0
        %825 = vmatprep.subr.mxu0 0.0
        %826 = vmatpush1.msra.mxu0 0.0
        %827 = vmatprep.subr.mxu0 0.0
        %828 = vmatpush1.msra.mxu0 0.0
        %829 = vmatprep.subr.mxu0 0.0
        %830 = vmatpush1.msra.mxu0 0.0
        %831 = vmatprep.subr.mxu0 0.0
        %832 = vmatpush1.msra.mxu0 0.0
        %833 = vmatprep.subr.mxu0 0.0
        %834 = vmatpush1.msra.mxu0 0.0
        %835 = vmatprep.subr.mxu0 0.0
        %836 = vmatpush1.msra.mxu0 0.0
        %837 = vmatprep.subr.mxu0 0.0
        %838 = vmatpush1.msra.mxu0 0.0
        %839 = vmatprep.subr.mxu0 0.0
        %840 = vmatpush1.msra.mxu0 0.0
        %841 = vmatprep.subr.mxu0 0.0
        %842 = vmatpush1.msra.mxu0 0.0
        %843 = vmatprep.subr.mxu0 0.0
        %844 = vmatpush1.msra.mxu0 0.0
        %845 = vmatprep.subr.mxu0 0.0
        %846 = vmatpush1.msra.mxu0 0.0
        %847 = vmatprep.subr.mxu0 0.0
        %848 = vmatpush1.msra.mxu0 0.0
        %849 = vmatprep.subr.mxu0 0.0
        %850 = vmatpush1.msra.mxu0 0.0
        %851 = vmatprep.subr.mxu0 0.0
        %852 = vmatpush1.msra.mxu0 0.0
        %853 = vmatprep.subr.mxu0 0.0
        %854 = vmatpush1.msra.mxu0 0.0
        %855 = vmatprep.subr.mxu0 0.0
        %856 = vmatpush1.msra.mxu0 0.0
        %857 = vmatprep.subr.mxu0 0.0
        %858 = vmatpush1.msra.mxu0 0.0
        %859 = vmatprep.subr.mxu0 0.0
        %860 = vmatpush1.msra.mxu0 0.0
        %861 = vmatprep.subr.mxu0 0.0
        %862 = vmatpush1.msra.mxu0 0.0
        %863 = vmatprep.subr.mxu0 0.0
        %864 = vmatpush1.msra.mxu0 0.0
        %865 = vmatprep.subr.mxu0 0.0
        %866 = vmatpush1.msra.mxu0 0.0
        %867 = vmatprep.subr.mxu0 0.0
        %868 = vmatpush1.msra.mxu0 0.0
        %869 = vmatprep.subr.mxu0 0.0
        %870 = vmatpush1.msra.mxu0 0.0
        %871 = vmatprep.subr.mxu0 0.0
        %872 = vmatpush1.msra.mxu0 0.0
        %873 = vmatprep.subr.mxu0 0.0
        %874 = vmatpush1.msra.mxu0 0.0
        %875 = vmatprep.subr.mxu0 0.0
        %876 = vmatpush1.msra.mxu0 0.0
        %877 = vmatprep.mubr.f32.mxu0 0.0
        %878 = vmatmul.mubr.f32.gmra.mrb[0].mxu0 %v811
        %v879 = vpop.f32.mrb[0].mxu0
        %v880 = vadd.f32 0.0, %v879
        %v881 = vpop.f32.mrb[0].mxu0
        %882 = vdwg.mxu0
        %v883 = vsel %vm810, %v657, 0
        %885 = vmatprep.subr.mxu0 0.0
        %886 = vmatpush1.msra.mxu0 %v730
        %887 = vmatprep.subr.mxu0 0.0
        %888 = vmatpush1.msra.mxu0 0.0
        %889 = vmatprep.subr.mxu0 0.0
        %890 = vmatpush1.msra.mxu0 0.0
        %891 = vmatprep.subr.mxu0 0.0
        %892 = vmatpush1.msra.mxu0 0.0
        %893 = vmatprep.subr.mxu0 0.0
        %894 = vmatpush1.msra.mxu0 0.0
        %895 = vmatprep.subr.mxu0 0.0
        %896 = vmatpush1.msra.mxu0 0.0
        %897 = vmatprep.subr.mxu0 0.0
        %898 = vmatpush1.msra.mxu0 0.0
        %899 = vmatprep.subr.mxu0 0.0
        %900 = vmatpush1.msra.mxu0 0.0
        %901 = vmatprep.subr.mxu0 0.0
        %902 = vmatpush1.msra.mxu0 0.0
        %903 = vmatprep.subr.mxu0 0.0
        %904 = vmatpush1.msra.mxu0 0.0
        %905 = vmatprep.subr.mxu0 0.0
        %906 = vmatpush1.msra.mxu0 0.0
        %907 = vmatprep.subr.mxu0 0.0
        %908 = vmatpush1.msra.mxu0 0.0
        %909 = vmatprep.subr.mxu0 0.0
        %910 = vmatpush1.msra.mxu0 0.0
        %911 = vmatprep.subr.mxu0 0.0
        %912 = vmatpush1.msra.mxu0 0.0
        %913 = vmatprep.subr.mxu0 0.0
        %914 = vmatpush1.msra.mxu0 0.0
        %915 = vmatprep.subr.mxu0 0.0
        %916 = vmatpush1.msra.mxu0 0.0
        %917 = vmatprep.subr.mxu0 0.0
        %918 = vmatpush1.msra.mxu0 0.0
        %919 = vmatprep.subr.mxu0 0.0
        %920 = vmatpush1.msra.mxu0 0.0
        %921 = vmatprep.subr.mxu0 0.0
        %922 = vmatpush1.msra.mxu0 0.0
        %923 = vmatprep.subr.mxu0 0.0
        %924 = vmatpush1.msra.mxu0 0.0
        %925 = vmatprep.subr.mxu0 0.0
        %926 = vmatpush1.msra.mxu0 0.0
        %927 = vmatprep.subr.mxu0 0.0
        %928 = vmatpush1.msra.mxu0 0.0
        %929 = vmatprep.subr.mxu0 0.0
        %930 = vmatpush1.msra.mxu0 0.0
        %931 = vmatprep.subr.mxu0 0.0
        %932 = vmatpush1.msra.mxu0 0.0
        %933 = vmatprep.subr.mxu0 0.0
        %934 = vmatpush1.msra.mxu0 0.0
        %935 = vmatprep.subr.mxu0 0.0
        %936 = vmatpush1.msra.mxu0 0.0
        %937 = vmatprep.subr.mxu0 0.0
        %938 = vmatpush1.msra.mxu0 0.0
        %939 = vmatprep.subr.mxu0 0.0
        %940 = vmatpush1.msra.mxu0 0.0
        %941 = vmatprep.subr.mxu0 0.0
        %942 = vmatpush1.msra.mxu0 0.0
        %943 = vmatprep.subr.mxu0 0.0
        %944 = vmatpush1.msra.mxu0 0.0
        %945 = vmatprep.subr.mxu0 0.0
        %946 = vmatpush1.msra.mxu0 0.0
        %947 = vmatprep.subr.mxu0 0.0
        %948 = vmatpush1.msra.mxu0 0.0
        %949 = vmatprep.mubr.f32.mxu0 0.0
        %950 = vmatmul.mubr.f32.gmra.mrb[0].mxu0 %v883
        %v951 = vpop.f32.mrb[0].mxu0
        %v952 = vadd.f32 0.0, %v951
        %v953 = vpop.f32.mrb[0].mxu0
        %954 = vdwg.mxu0
        %v955 = vsel %vm810, %v659, 0
        %957 = vmatprep.subr.mxu0 0.0
        %958 = vmatpush1.msra.mxu0 %v762
        %959 = vmatprep.subr.mxu0 0.0
        %960 = vmatpush1.msra.mxu0 0.0
        %961 = vmatprep.subr.mxu0 0.0
        %962 = vmatpush1.msra.mxu0 0.0
        %963 = vmatprep.subr.mxu0 0.0
        %964 = vmatpush1.msra.mxu0 0.0
        %965 = vmatprep.subr.mxu0 0.0
        %966 = vmatpush1.msra.mxu0 0.0
        %967 = vmatprep.subr.mxu0 0.0
        %968 = vmatpush1.msra.mxu0 0.0
        %969 = vmatprep.subr.mxu0 0.0
        %970 = vmatpush1.msra.mxu0 0.0
        %971 = vmatprep.subr.mxu0 0.0
        %972 = vmatpush1.msra.mxu0 0.0
        %973 = vmatprep.subr.mxu0 0.0
        %974 = vmatpush1.msra.mxu0 0.0
        %975 = vmatprep.subr.mxu0 0.0
        %976 = vmatpush1.msra.mxu0 0.0
        %977 = vmatprep.subr.mxu0 0.0
        %978 = vmatpush1.msra.mxu0 0.0
        %979 = vmatprep.subr.mxu0 0.0
        %980 = vmatpush1.msra.mxu0 0.0
        %981 = vmatprep.subr.mxu0 0.0
        %982 = vmatpush1.msra.mxu0 0.0
        %983 = vmatprep.subr.mxu0 0.0
        %984 = vmatpush1.msra.mxu0 0.0
        %985 = vmatprep.subr.mxu0 0.0
        %986 = vmatpush1.msra.mxu0 0.0
        %987 = vmatprep.subr.mxu0 0.0
        %988 = vmatpush1.msra.mxu0 0.0
        %989 = vmatprep.subr.mxu0 0.0
        %990 = vmatpush1.msra.mxu0 0.0
        %991 = vmatprep.subr.mxu0 0.0
        %992 = vmatpush1.msra.mxu0 0.0
        %993 = vmatprep.subr.mxu0 0.0
        %994 = vmatpush1.msra.mxu0 0.0
        %995 = vmatprep.subr.mxu0 0.0
        %996 = vmatpush1.msra.mxu0 0.0
        %997 = vmatprep.subr.mxu0 0.0
        %998 = vmatpush1.msra.mxu0 0.0
        %999 = vmatprep.subr.mxu0 0.0
        %1000 = vmatpush1.msra.mxu0 0.0
        %1001 = vmatprep.subr.mxu0 0.0
        %1002 = vmatpush1.msra.mxu0 0.0
        %1003 = vmatprep.subr.mxu0 0.0
        %1004 = vmatpush1.msra.mxu0 0.0
        %1005 = vmatprep.subr.mxu0 0.0
        %1006 = vmatpush1.msra.mxu0 0.0
        %1007 = vmatprep.subr.mxu0 0.0
        %1008 = vmatpush1.msra.mxu0 0.0
        %1009 = vmatprep.subr.mxu0 0.0
        %1010 = vmatpush1.msra.mxu0 0.0
        %1011 = vmatprep.subr.mxu0 0.0
        %1012 = vmatpush1.msra.mxu0 0.0
        %1013 = vmatprep.subr.mxu0 0.0
        %1014 = vmatpush1.msra.mxu0 0.0
        %1015 = vmatprep.subr.mxu0 0.0
        %1016 = vmatpush1.msra.mxu0 0.0
        %1017 = vmatprep.subr.mxu0 0.0
        %1018 = vmatpush1.msra.mxu0 0.0
        %1019 = vmatprep.subr.mxu0 0.0
        %1020 = vmatpush1.msra.mxu0 0.0
        %1021 = vmatprep.mubr.f32.mxu0 0.0
        %1022 = vmatmul.mubr.f32.gmra.mrb[0].mxu0 %v955
        %v1023 = vpop.f32.mrb[0].mxu0
        %v1024 = vadd.f32 0.0, %v1023
        %v1025 = vpop.f32.mrb[0].mxu0
        %1026 = vdwg.mxu0
        %v1027 = vsel %vm810, %v661, 0
        %1029 = vmatprep.subr.mxu0 0.0
        %1030 = vmatpush1.msra.mxu0 %v794
        %1031 = vmatprep.subr.mxu0 0.0
        %1032 = vmatpush1.msra.mxu0 0.0
        %1033 = vmatprep.subr.mxu0 0.0
        %1034 = vmatpush1.msra.mxu0 0.0
        %1035 = vmatprep.subr.mxu0 0.0
        %1036 = vmatpush1.msra.mxu0 0.0
        %1037 = vmatprep.subr.mxu0 0.0
        %1038 = vmatpush1.msra.mxu0 0.0
        %1039 = vmatprep.subr.mxu0 0.0
        %1040 = vmatpush1.msra.mxu0 0.0
        %1041 = vmatprep.subr.mxu0 0.0
        %1042 = vmatpush1.msra.mxu0 0.0
        %1043 = vmatprep.subr.mxu0 0.0
        %1044 = vmatpush1.msra.mxu0 0.0
        %1045 = vmatprep.subr.mxu0 0.0
        %1046 = vmatpush1.msra.mxu0 0.0
        %1047 = vmatprep.subr.mxu0 0.0
        %1048 = vmatpush1.msra.mxu0 0.0
        %1049 = vmatprep.subr.mxu0 0.0
        %1050 = vmatpush1.msra.mxu0 0.0
        %1051 = vmatprep.subr.mxu0 0.0
        %1052 = vmatpush1.msra.mxu0 0.0
        %1053 = vmatprep.subr.mxu0 0.0
        %1054 = vmatpush1.msra.mxu0 0.0
        %1055 = vmatprep.subr.mxu0 0.0
        %1056 = vmatpush1.msra.mxu0 0.0
        %1057 = vmatprep.subr.mxu0 0.0
        %1058 = vmatpush1.msra.mxu0 0.0
        %1059 = vmatprep.subr.mxu0 0.0
        %1060 = vmatpush1.msra.mxu0 0.0
        %1061 = vmatprep.subr.mxu0 0.0
        %1062 = vmatpush1.msra.mxu0 0.0
        %1063 = vmatprep.subr.mxu0 0.0
        %1064 = vmatpush1.msra.mxu0 0.0
        %1065 = vmatprep.subr.mxu0 0.0
        %1066 = vmatpush1.msra.mxu0 0.0
        %1067 = vmatprep.subr.mxu0 0.0
        %1068 = vmatpush1.msra.mxu0 0.0
        %1069 = vmatprep.subr.mxu0 0.0
        %1070 = vmatpush1.msra.mxu0 0.0
        %1071 = vmatprep.subr.mxu0 0.0
        %1072 = vmatpush1.msra.mxu0 0.0
        %1073 = vmatprep.subr.mxu0 0.0
        %1074 = vmatpush1.msra.mxu0 0.0
        %1075 = vmatprep.subr.mxu0 0.0
        %1076 = vmatpush1.msra.mxu0 0.0
        %1077 = vmatprep.subr.mxu0 0.0
        %1078 = vmatpush1.msra.mxu0 0.0
        %1079 = vmatprep.subr.mxu0 0.0
        %1080 = vmatpush1.msra.mxu0 0.0
        %1081 = vmatprep.subr.mxu0 0.0
        %1082 = vmatpush1.msra.mxu0 0.0
        %1083 = vmatprep.subr.mxu0 0.0
        %1084 = vmatpush1.msra.mxu0 0.0
        %1085 = vmatprep.subr.mxu0 0.0
        %1086 = vmatpush1.msra.mxu0 0.0
        %1087 = vmatprep.subr.mxu0 0.0
        %1088 = vmatpush1.msra.mxu0 0.0
        %1089 = vmatprep.subr.mxu0 0.0
        %1090 = vmatpush1.msra.mxu0 0.0
        %1091 = vmatprep.subr.mxu0 0.0
        %1092 = vmatpush1.msra.mxu0 0.0
        %1093 = vmatprep.mubr.f32.mxu0 0.0
        %1094 = vmatmul.mubr.f32.gmra.mrb[0].mxu0 %v1027
        %v1095 = vpop.f32.mrb[0].mxu0
        %v1096 = vadd.f32 0.0, %v1095
        %v1097 = vpop.f32.mrb[0].mxu0
        %1098 = vdwg.mxu0
        %v1099 = vlaneseq
        %v1100 = vshrl.u32 %v1099, 7
        %v1101 = vlaneseq
        %v1102 = vand.u32 %v1101, 127
        %vm1103 = vcmp.le.s32.totalorder %v1102, %v1100
        %v1104 = vsel %vm1103, 1, 0
        %vm1105 = vcmp.eq.s32.totalorder %v1104, 1
        %v1106 = vsel %vm1105, %v880, -1e+30
        %v1107 = vsel %vm1105, %v952, -1e+30
        %v1108 = vsel %vm1105, %v1024, -1e+30
        %v1109 = vsel %vm1105, %v1096, -1e+30
        %v1110 = vsel %vm810, %v1106, -inf
        %1111 = vmax.xlane.f32.xlu0 %v1110
        %v1112 = vpop.xlane.xlu0 %1111
        %v1113 = vsel %vm810, %v1107, -inf
        %1114 = vmax.xlane.f32.xlu0 %v1113
        %v1115 = vpop.xlane.xlu0 %1114
        %v1116 = vsel %vm810, %v1108, -inf
        %1117 = vmax.xlane.f32.xlu0 %v1116
        %v1118 = vpop.xlane.xlu0 %1117
        %v1119 = vsel %vm810, %v1109, -inf
        %1120 = vmax.xlane.f32.xlu0 %v1119
        %v1121 = vpop.xlane.xlu0 %1120
        %v1122 = vsub.f32 %v1106, %v1112
        %v1123 = vsub.f32 %v1107, %v1115
        %v1124 = vsub.f32 %v1108, %v1118
        %v1125 = vsub.f32 %v1109, %v1121
        %v1126 = vmul.f32 %v1122, 1.442695
        %v1127 = vpow.pop %v1126
        %v1128 = vmul.f32 %v1123, 1.442695
        %v1129 = vpow.pop %v1128
        %v1130 = vmul.f32 %v1124, 1.442695
        %v1131 = vpow.pop %v1130
        %v1132 = vmul.f32 %v1125, 1.442695
        %v1133 = vpow.pop %v1132
        %v1134 = vsel %vm810, %v1127, 0.0
        %1135 = vadd.xlane.f32.xlu0 %v1134
        %v1136 = vpop.xlane.xlu0 %1135
        %v1137 = vsel %vm810, %v1129, 0.0
        %1138 = vadd.xlane.f32.xlu0 %v1137
        %v1139 = vpop.xlane.xlu0 %1138
        %v1140 = vsel %vm810, %v1131, 0.0
        %1141 = vadd.xlane.f32.xlu0 %v1140
        %v1142 = vpop.xlane.xlu0 %1141
        %v1143 = vsel %vm810, %v1133, 0.0
        %1144 = vadd.xlane.f32.xlu0 %v1143
        %v1145 = vpop.xlane.xlu0 %1144
        %v1146 = vrcp.pop %v1136
        %v1147 = vrcp.pop %v1139
        %v1148 = vrcp.pop %v1142
        %v1149 = vrcp.pop %v1145
        %v1150 = vmul.f32 %v1127, %v1146
        %v1151 = vmul.f32 %v1129, %v1147
        %v1152 = vmul.f32 %v1131, %v1148
        %v1153 = vmul.f32 %v1133, %v1149
        %1154 = vxpose.xlu0.b32.start [1/16] %v651, 128
        %1155 = vxpose.xlu0.b32.cont [2/16] 0.0, 128
        %1156 = vxpose.xlu0.b32.cont [3/16] 0.0, 128
        %1157 = vxpose.xlu0.b32.cont [4/16] 0.0, 128
        %1158 = vxpose.xlu0.b32.cont [5/16] 0.0, 128
        %1159 = vxpose.xlu0.b32.cont [6/16] 0.0, 128
        %1160 = vxpose.xlu0.b32.cont [7/16] 0.0, 128
        %1161 = vxpose.xlu0.b32.cont [8/16] 0.0, 128
        %1162 = vxpose.xlu0.b32.cont [9/16] 0.0, 128
        %1163 = vxpose.xlu0.b32.cont [10/16] 0.0, 128
        %1164 = vxpose.xlu0.b32.cont [11/16] 0.0, 128
        %1165 = vxpose.xlu0.b32.cont [12/16] 0.0, 128
        %1166 = vxpose.xlu0.b32.cont [13/16] 0.0, 128
        %1167 = vxpose.xlu0.b32.cont [14/16] 0.0, 128
        %1168 = vxpose.xlu0.b32.cont [15/16] 0.0, 128
        %1169 = vxpose.xlu0.b32.end [16/16] 0.0, 128
        %v1170 = vpop.trf.xlu0
        %v1171 = vpop.trf.xlu0
        %v1172 = vpop.trf.xlu0
        %v1173 = vpop.trf.xlu0
        %v1174 = vpop.trf.xlu0
        %v1175 = vpop.trf.xlu0
        %v1176 = vpop.trf.xlu0
        %v1177 = vpop.trf.xlu0
        %v1178 = vpop.trf.xlu0
        %v1179 = vpop.trf.xlu0
        %v1180 = vpop.trf.xlu0
        %v1181 = vpop.trf.xlu0
        %v1182 = vpop.trf.xlu0
        %v1183 = vpop.trf.xlu0
        %v1184 = vpop.trf.xlu0
        %v1185 = vpop.trf.xlu0
        %1186 = vxpose.xlu0.b32.start [1/16] %v674, 128
        %1187 = vxpose.xlu0.b32.cont [2/16] 0.0, 128
        %1188 = vxpose.xlu0.b32.cont [3/16] 0.0, 128
        %1189 = vxpose.xlu0.b32.cont [4/16] 0.0, 128
        %1190 = vxpose.xlu0.b32.cont [5/16] 0.0, 128
        %1191 = vxpose.xlu0.b32.cont [6/16] 0.0, 128
        %1192 = vxpose.xlu0.b32.cont [7/16] 0.0, 128
        %1193 = vxpose.xlu0.b32.cont [8/16] 0.0, 128
        %1194 = vxpose.xlu0.b32.cont [9/16] 0.0, 128
        %1195 = vxpose.xlu0.b32.cont [10/16] 0.0, 128
        %1196 = vxpose.xlu0.b32.cont [11/16] 0.0, 128
        %1197 = vxpose.xlu0.b32.cont [12/16] 0.0, 128
        %1198 = vxpose.xlu0.b32.cont [13/16] 0.0, 128
        %1199 = vxpose.xlu0.b32.cont [14/16] 0.0, 128
        %1200 = vxpose.xlu0.b32.cont [15/16] 0.0, 128
        %1201 = vxpose.xlu0.b32.end [16/16] 0.0, 128
        %v1202 = vpop.trf.xlu0
        %v1203 = vpop.trf.xlu0
        %v1204 = vpop.trf.xlu0
        %v1205 = vpop.trf.xlu0
        %v1206 = vpop.trf.xlu0
        %v1207 = vpop.trf.xlu0
        %v1208 = vpop.trf.xlu0
        %v1209 = vpop.trf.xlu0
        %v1210 = vpop.trf.xlu0
        %v1211 = vpop.trf.xlu0
        %v1212 = vpop.trf.xlu0
        %v1213 = vpop.trf.xlu0
        %v1214 = vpop.trf.xlu0
        %v1215 = vpop.trf.xlu0
        %v1216 = vpop.trf.xlu0
        %v1217 = vpop.trf.xlu0
        %1218 = vxpose.xlu0.b32.start [1/16] %v677, 128
        %1219 = vxpose.xlu0.b32.cont [2/16] 0.0, 128
        %1220 = vxpose.xlu0.b32.cont [3/16] 0.0, 128
        %1221 = vxpose.xlu0.b32.cont [4/16] 0.0, 128
        %1222 = vxpose.xlu0.b32.cont [5/16] 0.0, 128
        %1223 = vxpose.xlu0.b32.cont [6/16] 0.0, 128
        %1224 = vxpose.xlu0.b32.cont [7/16] 0.0, 128
        %1225 = vxpose.xlu0.b32.cont [8/16] 0.0, 128
        %1226 = vxpose.xlu0.b32.cont [9/16] 0.0, 128
        %1227 = vxpose.xlu0.b32.cont [10/16] 0.0, 128
        %1228 = vxpose.xlu0.b32.cont [11/16] 0.0, 128
        %1229 = vxpose.xlu0.b32.cont [12/16] 0.0, 128
        %1230 = vxpose.xlu0.b32.cont [13/16] 0.0, 128
        %1231 = vxpose.xlu0.b32.cont [14/16] 0.0, 128
        %1232 = vxpose.xlu0.b32.cont [15/16] 0.0, 128
        %1233 = vxpose.xlu0.b32.end [16/16] 0.0, 128
        %v1234 = vpop.trf.xlu0
        %v1235 = vpop.trf.xlu0
        %v1236 = vpop.trf.xlu0
        %v1237 = vpop.trf.xlu0
        %v1238 = vpop.trf.xlu0
        %v1239 = vpop.trf.xlu0
        %v1240 = vpop.trf.xlu0
        %v1241 = vpop.trf.xlu0
        %v1242 = vpop.trf.xlu0
        %v1243 = vpop.trf.xlu0
        %v1244 = vpop.trf.xlu0
        %v1245 = vpop.trf.xlu0
        %v1246 = vpop.trf.xlu0
        %v1247 = vpop.trf.xlu0
        %v1248 = vpop.trf.xlu0
        %v1249 = vpop.trf.xlu0
        %1250 = vxpose.xlu0.b32.start [1/16] %v680, 128
        %1251 = vxpose.xlu0.b32.cont [2/16] 0.0, 128
        %1252 = vxpose.xlu0.b32.cont [3/16] 0.0, 128
        %1253 = vxpose.xlu0.b32.cont [4/16] 0.0, 128
        %1254 = vxpose.xlu0.b32.cont [5/16] 0.0, 128
        %1255 = vxpose.xlu0.b32.cont [6/16] 0.0, 128
        %1256 = vxpose.xlu0.b32.cont [7/16] 0.0, 128
        %1257 = vxpose.xlu0.b32.cont [8/16] 0.0, 128
        %1258 = vxpose.xlu0.b32.cont [9/16] 0.0, 128
        %1259 = vxpose.xlu0.b32.cont [10/16] 0.0, 128
        %1260 = vxpose.xlu0.b32.cont [11/16] 0.0, 128
        %1261 = vxpose.xlu0.b32.cont [12/16] 0.0, 128
        %1262 = vxpose.xlu0.b32.cont [13/16] 0.0, 128
        %1263 = vxpose.xlu0.b32.cont [14/16] 0.0, 128
        %1264 = vxpose.xlu0.b32.cont [15/16] 0.0, 128
        %1265 = vxpose.xlu0.b32.end [16/16] 0.0, 128
        %v1266 = vpop.trf.xlu0
        %v1267 = vpop.trf.xlu0
        %v1268 = vpop.trf.xlu0
        %v1269 = vpop.trf.xlu0
        %v1270 = vpop.trf.xlu0
        %v1271 = vpop.trf.xlu0
        %v1272 = vpop.trf.xlu0
        %v1273 = vpop.trf.xlu0
        %v1274 = vpop.trf.xlu0
        %v1275 = vpop.trf.xlu0
        %v1276 = vpop.trf.xlu0
        %v1277 = vpop.trf.xlu0
        %v1278 = vpop.trf.xlu0
        %v1279 = vpop.trf.xlu0
        %v1280 = vpop.trf.xlu0
        %v1281 = vpop.trf.xlu0
        %v1283 = vsel %vm810, %v1170, 0
        %v1286 = vsel %vm810, %v1150, 0
        %1288 = vmatprep.subr.mxu0 0.0
        %1289 = vmatpush1.xpose.msra.mxu0 %v1286
        %1290 = vmatprep.subr.mxu0 0.0
        %1291 = vmatpush1.xpose.msra.mxu0 0.0
        %1292 = vmatprep.subr.mxu0 0.0
        %1293 = vmatpush1.xpose.msra.mxu0 0.0
        %1294 = vmatprep.subr.mxu0 0.0
        %1295 = vmatpush1.xpose.msra.mxu0 0.0
        %1296 = vmatprep.subr.mxu0 0.0
        %1297 = vmatpush1.xpose.msra.mxu0 0.0
        %1298 = vmatprep.subr.mxu0 0.0
        %1299 = vmatpush1.xpose.msra.mxu0 0.0
        %1300 = vmatprep.subr.mxu0 0.0
        %1301 = vmatpush1.xpose.msra.mxu0 0.0
        %1302 = vmatprep.subr.mxu0 0.0
        %1303 = vmatpush1.xpose.msra.mxu0 0.0
        %1304 = vmatprep.subr.mxu0 0.0
        %1305 = vmatpush1.xpose.msra.mxu0 0.0
        %1306 = vmatprep.subr.mxu0 0.0
        %1307 = vmatpush1.xpose.msra.mxu0 0.0
        %1308 = vmatprep.subr.mxu0 0.0
        %1309 = vmatpush1.xpose.msra.mxu0 0.0
        %1310 = vmatprep.subr.mxu0 0.0
        %1311 = vmatpush1.xpose.msra.mxu0 0.0
        %1312 = vmatprep.subr.mxu0 0.0
        %1313 = vmatpush1.xpose.msra.mxu0 0.0
        %1314 = vmatprep.subr.mxu0 0.0
        %1315 = vmatpush1.xpose.msra.mxu0 0.0
        %1316 = vmatprep.subr.mxu0 0.0
        %1317 = vmatpush1.xpose.msra.mxu0 0.0
        %1318 = vmatprep.subr.mxu0 0.0
        %1319 = vmatpush1.xpose.msra.mxu0 0.0
        %1320 = vmatprep.subr.mxu0 0.0
        %1321 = vmatpush1.xpose.msra.mxu0 0.0
        %1322 = vmatprep.subr.mxu0 0.0
        %1323 = vmatpush1.xpose.msra.mxu0 0.0
        %1324 = vmatprep.subr.mxu0 0.0
        %1325 = vmatpush1.xpose.msra.mxu0 0.0
        %1326 = vmatprep.subr.mxu0 0.0
        %1327 = vmatpush1.xpose.msra.mxu0 0.0
        %1328 = vmatprep.subr.mxu0 0.0
        %1329 = vmatpush1.xpose.msra.mxu0 0.0
        %1330 = vmatprep.subr.mxu0 0.0
        %1331 = vmatpush1.xpose.msra.mxu0 0.0
        %1332 = vmatprep.subr.mxu0 0.0
        %1333 = vmatpush1.xpose.msra.mxu0 0.0
        %1334 = vmatprep.subr.mxu0 0.0
        %1335 = vmatpush1.xpose.msra.mxu0 0.0
        %1336 = vmatprep.subr.mxu0 0.0
        %1337 = vmatpush1.xpose.msra.mxu0 0.0
        %1338 = vmatprep.subr.mxu0 0.0
        %1339 = vmatpush1.xpose.msra.mxu0 0.0
        %1340 = vmatprep.subr.mxu0 0.0
        %1341 = vmatpush1.xpose.msra.mxu0 0.0
        %1342 = vmatprep.subr.mxu0 0.0
        %1343 = vmatpush1.xpose.msra.mxu0 0.0
        %1344 = vmatprep.subr.mxu0 0.0
        %1345 = vmatpush1.xpose.msra.mxu0 0.0
        %1346 = vmatprep.subr.mxu0 0.0
        %1347 = vmatpush1.xpose.msra.mxu0 0.0
        %1348 = vmatprep.subr.mxu0 0.0
        %1349 = vmatpush1.xpose.msra.mxu0 0.0
        %1350 = vmatprep.subr.mxu0 0.0
        %1351 = vmatpush1.xpose.msra.mxu0 0.0
        %1352 = vmatprep.mubr.f32.mxu0 0.0
        %1353 = vmatmul.mubr.f32.gmra.mrb[0].mxu0 %v1283
        %v1354 = vpop.f32.mrb[0].mxu0
        %v1355 = vadd.f32 0.0, %v1354
        %v1356 = vpop.f32.mrb[0].mxu0
        %1357 = vdwg.mxu0
        %v1359 = vsel %vm810, %v1202, 0
        %v1362 = vsel %vm810, %v1151, 0
        %1364 = vmatprep.subr.mxu0 0.0
        %1365 = vmatpush1.xpose.msra.mxu0 %v1362
        %1366 = vmatprep.subr.mxu0 0.0
        %1367 = vmatpush1.xpose.msra.mxu0 0.0
        %1368 = vmatprep.subr.mxu0 0.0
        %1369 = vmatpush1.xpose.msra.mxu0 0.0
        %1370 = vmatprep.subr.mxu0 0.0
        %1371 = vmatpush1.xpose.msra.mxu0 0.0
        %1372 = vmatprep.subr.mxu0 0.0
        %1373 = vmatpush1.xpose.msra.mxu0 0.0
        %1374 = vmatprep.subr.mxu0 0.0
        %1375 = vmatpush1.xpose.msra.mxu0 0.0
        %1376 = vmatprep.subr.mxu0 0.0
        %1377 = vmatpush1.xpose.msra.mxu0 0.0
        %1378 = vmatprep.subr.mxu0 0.0
        %1379 = vmatpush1.xpose.msra.mxu0 0.0
        %1380 = vmatprep.subr.mxu0 0.0
        %1381 = vmatpush1.xpose.msra.mxu0 0.0
        %1382 = vmatprep.subr.mxu0 0.0
        %1383 = vmatpush1.xpose.msra.mxu0 0.0
        %1384 = vmatprep.subr.mxu0 0.0
        %1385 = vmatpush1.xpose.msra.mxu0 0.0
        %1386 = vmatprep.subr.mxu0 0.0
        %1387 = vmatpush1.xpose.msra.mxu0 0.0
        %1388 = vmatprep.subr.mxu0 0.0
        %1389 = vmatpush1.xpose.msra.mxu0 0.0
        %1390 = vmatprep.subr.mxu0 0.0
        %1391 = vmatpush1.xpose.msra.mxu0 0.0
        %1392 = vmatprep.subr.mxu0 0.0
        %1393 = vmatpush1.xpose.msra.mxu0 0.0
        %1394 = vmatprep.subr.mxu0 0.0
        %1395 = vmatpush1.xpose.msra.mxu0 0.0
        %1396 = vmatprep.subr.mxu0 0.0
        %1397 = vmatpush1.xpose.msra.mxu0 0.0
        %1398 = vmatprep.subr.mxu0 0.0
        %1399 = vmatpush1.xpose.msra.mxu0 0.0
        %1400 = vmatprep.subr.mxu0 0.0
        %1401 = vmatpush1.xpose.msra.mxu0 0.0
        %1402 = vmatprep.subr.mxu0 0.0
        %1403 = vmatpush1.xpose.msra.mxu0 0.0
        %1404 = vmatprep.subr.mxu0 0.0
        %1405 = vmatpush1.xpose.msra.mxu0 0.0
        %1406 = vmatprep.subr.mxu0 0.0
        %1407 = vmatpush1.xpose.msra.mxu0 0.0
        %1408 = vmatprep.subr.mxu0 0.0
        %1409 = vmatpush1.xpose.msra.mxu0 0.0
        %1410 = vmatprep.subr.mxu0 0.0
        %1411 = vmatpush1.xpose.msra.mxu0 0.0
        %1412 = vmatprep.subr.mxu0 0.0
        %1413 = vmatpush1.xpose.msra.mxu0 0.0
        %1414 = vmatprep.subr.mxu0 0.0
        %1415 = vmatpush1.xpose.msra.mxu0 0.0
        %1416 = vmatprep.subr.mxu0 0.0
        %1417 = vmatpush1.xpose.msra.mxu0 0.0
        %1418 = vmatprep.subr.mxu0 0.0
        %1419 = vmatpush1.xpose.msra.mxu0 0.0
        %1420 = vmatprep.subr.mxu0 0.0
        %1421 = vmatpush1.xpose.msra.mxu0 0.0
        %1422 = vmatprep.subr.mxu0 0.0
        %1423 = vmatpush1.xpose.msra.mxu0 0.0
        %1424 = vmatprep.subr.mxu0 0.0
        %1425 = vmatpush1.xpose.msra.mxu0 0.0
        %1426 = vmatprep.subr.mxu0 0.0
        %1427 = vmatpush1.xpose.msra.mxu0 0.0
        %1428 = vmatprep.mubr.f32.mxu0 0.0
        %1429 = vmatmul.mubr.f32.gmra.mrb[0].mxu0 %v1359
        %v1430 = vpop.f32.mrb[0].mxu0
        %v1431 = vadd.f32 0.0, %v1430
        %v1432 = vpop.f32.mrb[0].mxu0
        %1433 = vdwg.mxu0
        %v1435 = vsel %vm810, %v1234, 0
        %v1438 = vsel %vm810, %v1152, 0
        %1440 = vmatprep.subr.mxu0 0.0
        %1441 = vmatpush1.xpose.msra.mxu0 %v1438
        %1442 = vmatprep.subr.mxu0 0.0
        %1443 = vmatpush1.xpose.msra.mxu0 0.0
        %1444 = vmatprep.subr.mxu0 0.0
        %1445 = vmatpush1.xpose.msra.mxu0 0.0
        %1446 = vmatprep.subr.mxu0 0.0
        %1447 = vmatpush1.xpose.msra.mxu0 0.0
        %1448 = vmatprep.subr.mxu0 0.0
        %1449 = vmatpush1.xpose.msra.mxu0 0.0
        %1450 = vmatprep.subr.mxu0 0.0
        %1451 = vmatpush1.xpose.msra.mxu0 0.0
        %1452 = vmatprep.subr.mxu0 0.0
        %1453 = vmatpush1.xpose.msra.mxu0 0.0
        %1454 = vmatprep.subr.mxu0 0.0
        %1455 = vmatpush1.xpose.msra.mxu0 0.0
        %1456 = vmatprep.subr.mxu0 0.0
        %1457 = vmatpush1.xpose.msra.mxu0 0.0
        %1458 = vmatprep.subr.mxu0 0.0
        %1459 = vmatpush1.xpose.msra.mxu0 0.0
        %1460 = vmatprep.subr.mxu0 0.0
        %1461 = vmatpush1.xpose.msra.mxu0 0.0
        %1462 = vmatprep.subr.mxu0 0.0
        %1463 = vmatpush1.xpose.msra.mxu0 0.0
        %1464 = vmatprep.subr.mxu0 0.0
        %1465 = vmatpush1.xpose.msra.mxu0 0.0
        %1466 = vmatprep.subr.mxu0 0.0
        %1467 = vmatpush1.xpose.msra.mxu0 0.0
        %1468 = vmatprep.subr.mxu0 0.0
        %1469 = vmatpush1.xpose.msra.mxu0 0.0
        %1470 = vmatprep.subr.mxu0 0.0
        %1471 = vmatpush1.xpose.msra.mxu0 0.0
        %1472 = vmatprep.subr.mxu0 0.0
        %1473 = vmatpush1.xpose.msra.mxu0 0.0
        %1474 = vmatprep.subr.mxu0 0.0
        %1475 = vmatpush1.xpose.msra.mxu0 0.0
        %1476 = vmatprep.subr.mxu0 0.0
        %1477 = vmatpush1.xpose.msra.mxu0 0.0
        %1478 = vmatprep.subr.mxu0 0.0
        %1479 = vmatpush1.xpose.msra.mxu0 0.0
        %1480 = vmatprep.subr.mxu0 0.0
        %1481 = vmatpush1.xpose.msra.mxu0 0.0
        %1482 = vmatprep.subr.mxu0 0.0
        %1483 = vmatpush1.xpose.msra.mxu0 0.0
        %1484 = vmatprep.subr.mxu0 0.0
        %1485 = vmatpush1.xpose.msra.mxu0 0.0
        %1486 = vmatprep.subr.mxu0 0.0
        %1487 = vmatpush1.xpose.msra.mxu0 0.0
        %1488 = vmatprep.subr.mxu0 0.0
        %1489 = vmatpush1.xpose.msra.mxu0 0.0
        %1490 = vmatprep.subr.mxu0 0.0
        %1491 = vmatpush1.xpose.msra.mxu0 0.0
        %1492 = vmatprep.subr.mxu0 0.0
        %1493 = vmatpush1.xpose.msra.mxu0 0.0
        %1494 = vmatprep.subr.mxu0 0.0
        %1495 = vmatpush1.xpose.msra.mxu0 0.0
        %1496 = vmatprep.subr.mxu0 0.0
        %1497 = vmatpush1.xpose.msra.mxu0 0.0
        %1498 = vmatprep.subr.mxu0 0.0
        %1499 = vmatpush1.xpose.msra.mxu0 0.0
        %1500 = vmatprep.subr.mxu0 0.0
        %1501 = vmatpush1.xpose.msra.mxu0 0.0
        %1502 = vmatprep.subr.mxu0 0.0
        %1503 = vmatpush1.xpose.msra.mxu0 0.0
        %1504 = vmatprep.mubr.f32.mxu0 0.0
        %1505 = vmatmul.mubr.f32.gmra.mrb[0].mxu0 %v1435
        %v1506 = vpop.f32.mrb[0].mxu0
        %v1507 = vadd.f32 0.0, %v1506
        %v1508 = vpop.f32.mrb[0].mxu0
        %1509 = vdwg.mxu0
        %v1511 = vsel %vm810, %v1266, 0
        %v1514 = vsel %vm810, %v1153, 0
        %1516 = vmatprep.subr.mxu0 0.0
        %1517 = vmatpush1.xpose.msra.mxu0 %v1514
        %1518 = vmatprep.subr.mxu0 0.0
        %1519 = vmatpush1.xpose.msra.mxu0 0.0
        %1520 = vmatprep.subr.mxu0 0.0
        %1521 = vmatpush1.xpose.msra.mxu0 0.0
        %1522 = vmatprep.subr.mxu0 0.0
        %1523 = vmatpush1.xpose.msra.mxu0 0.0
        %1524 = vmatprep.subr.mxu0 0.0
        %1525 = vmatpush1.xpose.msra.mxu0 0.0
        %1526 = vmatprep.subr.mxu0 0.0
        %1527 = vmatpush1.xpose.msra.mxu0 0.0
        %1528 = vmatprep.subr.mxu0 0.0
        %1529 = vmatpush1.xpose.msra.mxu0 0.0
        %1530 = vmatprep.subr.mxu0 0.0
        %1531 = vmatpush1.xpose.msra.mxu0 0.0
        %1532 = vmatprep.subr.mxu0 0.0
        %1533 = vmatpush1.xpose.msra.mxu0 0.0
        %1534 = vmatprep.subr.mxu0 0.0
        %1535 = vmatpush1.xpose.msra.mxu0 0.0
        %1536 = vmatprep.subr.mxu0 0.0
        %1537 = vmatpush1.xpose.msra.mxu0 0.0
        %1538 = vmatprep.subr.mxu0 0.0
        %1539 = vmatpush1.xpose.msra.mxu0 0.0
        %1540 = vmatprep.subr.mxu0 0.0
        %1541 = vmatpush1.xpose.msra.mxu0 0.0
        %1542 = vmatprep.subr.mxu0 0.0
        %1543 = vmatpush1.xpose.msra.mxu0 0.0
        %1544 = vmatprep.subr.mxu0 0.0
        %1545 = vmatpush1.xpose.msra.mxu0 0.0
        %1546 = vmatprep.subr.mxu0 0.0
        %1547 = vmatpush1.xpose.msra.mxu0 0.0
        %1548 = vmatprep.subr.mxu0 0.0
        %1549 = vmatpush1.xpose.msra.mxu0 0.0
        %1550 = vmatprep.subr.mxu0 0.0
        %1551 = vmatpush1.xpose.msra.mxu0 0.0
        %1552 = vmatprep.subr.mxu0 0.0
        %1553 = vmatpush1.xpose.msra.mxu0 0.0
        %1554 = vmatprep.subr.mxu0 0.0
        %1555 = vmatpush1.xpose.msra.mxu0 0.0
        %1556 = vmatprep.subr.mxu0 0.0
        %1557 = vmatpush1.xpose.msra.mxu0 0.0
        %1558 = vmatprep.subr.mxu0 0.0
        %1559 = vmatpush1.xpose.msra.mxu0 0.0
        %1560 = vmatprep.subr.mxu0 0.0
        %1561 = vmatpush1.xpose.msra.mxu0 0.0
        %1562 = vmatprep.subr.mxu0 0.0
        %1563 = vmatpush1.xpose.msra.mxu0 0.0
        %1564 = vmatprep.subr.mxu0 0.0
        %1565 = vmatpush1.xpose.msra.mxu0 0.0
        %1566 = vmatprep.subr.mxu0 0.0
        %1567 = vmatpush1.xpose.msra.mxu0 0.0
        %1568 = vmatprep.subr.mxu0 0.0
        %1569 = vmatpush1.xpose.msra.mxu0 0.0
        %1570 = vmatprep.subr.mxu0 0.0
        %1571 = vmatpush1.xpose.msra.mxu0 0.0
        %1572 = vmatprep.subr.mxu0 0.0
        %1573 = vmatpush1.xpose.msra.mxu0 0.0
        %1574 = vmatprep.subr.mxu0 0.0
        %1575 = vmatpush1.xpose.msra.mxu0 0.0
        %1576 = vmatprep.subr.mxu0 0.0
        %1577 = vmatpush1.xpose.msra.mxu0 0.0
        %1578 = vmatprep.subr.mxu0 0.0
        %1579 = vmatpush1.xpose.msra.mxu0 0.0
        %1580 = vmatprep.mubr.f32.mxu0 0.0
        %1581 = vmatmul.mubr.f32.gmra.mrb[0].mxu0 %v1511
        %v1582 = vpop.f32.mrb[0].mxu0
        %v1583 = vadd.f32 0.0, %v1582
        %v1584 = vpop.f32.mrb[0].mxu0
        %1585 = vdwg.mxu0
        %1586 = vxpose.xlu0.b32.start [1/16] %v1355, 128
        %1587 = vxpose.xlu0.b32.cont [2/16] 0.0, 128
        %1588 = vxpose.xlu0.b32.cont [3/16] 0.0, 128
        %1589 = vxpose.xlu0.b32.cont [4/16] 0.0, 128
        %1590 = vxpose.xlu0.b32.cont [5/16] 0.0, 128
        %1591 = vxpose.xlu0.b32.cont [6/16] 0.0, 128
        %1592 = vxpose.xlu0.b32.cont [7/16] 0.0, 128
        %1593 = vxpose.xlu0.b32.cont [8/16] 0.0, 128
        %1594 = vxpose.xlu0.b32.cont [9/16] 0.0, 128
        %1595 = vxpose.xlu0.b32.cont [10/16] 0.0, 128
        %1596 = vxpose.xlu0.b32.cont [11/16] 0.0, 128
        %1597 = vxpose.xlu0.b32.cont [12/16] 0.0, 128
        %1598 = vxpose.xlu0.b32.cont [13/16] 0.0, 128
        %1599 = vxpose.xlu0.b32.cont [14/16] 0.0, 128
        %1600 = vxpose.xlu0.b32.cont [15/16] 0.0, 128
        %1601 = vxpose.xlu0.b32.end [16/16] 0.0, 128
        %v1602 = vpop.trf.xlu0
        %v1603 = vpop.trf.xlu0
        %v1604 = vpop.trf.xlu0
        %v1605 = vpop.trf.xlu0
        %v1606 = vpop.trf.xlu0
        %v1607 = vpop.trf.xlu0
        %v1608 = vpop.trf.xlu0
        %v1609 = vpop.trf.xlu0
        %v1610 = vpop.trf.xlu0
        %v1611 = vpop.trf.xlu0
        %v1612 = vpop.trf.xlu0
        %v1613 = vpop.trf.xlu0
        %v1614 = vpop.trf.xlu0
        %v1615 = vpop.trf.xlu0
        %v1616 = vpop.trf.xlu0
        %v1617 = vpop.trf.xlu0
        %1618 = vxpose.xlu0.b32.start [1/16] %v1431, 128
        %1619 = vxpose.xlu0.b32.cont [2/16] 0.0, 128
        %1620 = vxpose.xlu0.b32.cont [3/16] 0.0, 128
        %1621 = vxpose.xlu0.b32.cont [4/16] 0.0, 128
        %1622 = vxpose.xlu0.b32.cont [5/16] 0.0, 128
        %1623 = vxpose.xlu0.b32.cont [6/16] 0.0, 128
        %1624 = vxpose.xlu0.b32.cont [7/16] 0.0, 128
        %1625 = vxpose.xlu0.b32.cont [8/16] 0.0, 128
        %1626 = vxpose.xlu0.b32.cont [9/16] 0.0, 128
        %1627 = vxpose.xlu0.b32.cont [10/16] 0.0, 128
        %1628 = vxpose.xlu0.b32.cont [11/16] 0.0, 128
        %1629 = vxpose.xlu0.b32.cont [12/16] 0.0, 128
        %1630 = vxpose.xlu0.b32.cont [13/16] 0.0, 128
        %1631 = vxpose.xlu0.b32.cont [14/16] 0.0, 128
        %1632 = vxpose.xlu0.b32.cont [15/16] 0.0, 128
        %1633 = vxpose.xlu0.b32.end [16/16] 0.0, 128
        %v1634 = vpop.trf.xlu0
        %v1635 = vpop.trf.xlu0
        %v1636 = vpop.trf.xlu0
        %v1637 = vpop.trf.xlu0
        %v1638 = vpop.trf.xlu0
        %v1639 = vpop.trf.xlu0
        %v1640 = vpop.trf.xlu0
        %v1641 = vpop.trf.xlu0
        %v1642 = vpop.trf.xlu0
        %v1643 = vpop.trf.xlu0
        %v1644 = vpop.trf.xlu0
        %v1645 = vpop.trf.xlu0
        %v1646 = vpop.trf.xlu0
        %v1647 = vpop.trf.xlu0
        %v1648 = vpop.trf.xlu0
        %v1649 = vpop.trf.xlu0
        %1650 = vxpose.xlu0.b32.start [1/16] %v1507, 128
        %1651 = vxpose.xlu0.b32.cont [2/16] 0.0, 128
        %1652 = vxpose.xlu0.b32.cont [3/16] 0.0, 128
        %1653 = vxpose.xlu0.b32.cont [4/16] 0.0, 128
        %1654 = vxpose.xlu0.b32.cont [5/16] 0.0, 128
        %1655 = vxpose.xlu0.b32.cont [6/16] 0.0, 128
        %1656 = vxpose.xlu0.b32.cont [7/16] 0.0, 128
        %1657 = vxpose.xlu0.b32.cont [8/16] 0.0, 128
        %1658 = vxpose.xlu0.b32.cont [9/16] 0.0, 128
        %1659 = vxpose.xlu0.b32.cont [10/16] 0.0, 128
        %1660 = vxpose.xlu0.b32.cont [11/16] 0.0, 128
        %1661 = vxpose.xlu0.b32.cont [12/16] 0.0, 128
        %1662 = vxpose.xlu0.b32.cont [13/16] 0.0, 128
        %1663 = vxpose.xlu0.b32.cont [14/16] 0.0, 128
        %1664 = vxpose.xlu0.b32.cont [15/16] 0.0, 128
        %1665 = vxpose.xlu0.b32.end [16/16] 0.0, 128
        %v1666 = vpop.trf.xlu0
        %v1667 = vpop.trf.xlu0
        %v1668 = vpop.trf.xlu0
        %v1669 = vpop.trf.xlu0
        %v1670 = vpop.trf.xlu0
        %v1671 = vpop.trf.xlu0
        %v1672 = vpop.trf.xlu0
        %v1673 = vpop.trf.xlu0
        %v1674 = vpop.trf.xlu0
        %v1675 = vpop.trf.xlu0
        %v1676 = vpop.trf.xlu0
        %v1677 = vpop.trf.xlu0
        %v1678 = vpop.trf.xlu0
        %v1679 = vpop.trf.xlu0
        %v1680 = vpop.trf.xlu0
        %v1681 = vpop.trf.xlu0
        %1682 = vxpose.xlu0.b32.start [1/16] %v1583, 128
        %1683 = vxpose.xlu0.b32.cont [2/16] 0.0, 128
        %1684 = vxpose.xlu0.b32.cont [3/16] 0.0, 128
        %1685 = vxpose.xlu0.b32.cont [4/16] 0.0, 128
        %1686 = vxpose.xlu0.b32.cont [5/16] 0.0, 128
        %1687 = vxpose.xlu0.b32.cont [6/16] 0.0, 128
        %1688 = vxpose.xlu0.b32.cont [7/16] 0.0, 128
        %1689 = vxpose.xlu0.b32.cont [8/16] 0.0, 128
        %1690 = vxpose.xlu0.b32.cont [9/16] 0.0, 128
        %1691 = vxpose.xlu0.b32.cont [10/16] 0.0, 128
        %1692 = vxpose.xlu0.b32.cont [11/16] 0.0, 128
        %1693 = vxpose.xlu0.b32.cont [12/16] 0.0, 128
        %1694 = vxpose.xlu0.b32.cont [13/16] 0.0, 128
        %1695 = vxpose.xlu0.b32.cont [14/16] 0.0, 128
        %1696 = vxpose.xlu0.b32.cont [15/16] 0.0, 128
        %1697 = vxpose.xlu0.b32.end [16/16] 0.0, 128
        %v1698 = vpop.trf.xlu0
        %v1699 = vpop.trf.xlu0
        %v1700 = vpop.trf.xlu0
        %v1701 = vpop.trf.xlu0
        %v1702 = vpop.trf.xlu0
        %v1703 = vpop.trf.xlu0
        %v1704 = vpop.trf.xlu0
        %v1705 = vpop.trf.xlu0
        %v1706 = vpop.trf.xlu0
        %v1707 = vpop.trf.xlu0
        %v1708 = vpop.trf.xlu0
        %v1709 = vpop.trf.xlu0
        %v1710 = vpop.trf.xlu0
        %v1711 = vpop.trf.xlu0
        %v1712 = vpop.trf.xlu0
        %v1713 = vpop.trf.xlu0
        %v1714 = vcombine.low %v1602, %v1666
        %v1715 = vcombine.high %v1602, %v1666
        %v1717 = vunpack.c.l.s4 1983009808
        %v1718 = vunpack.c.0.s8 %v1717
        %v1719 = vlaneseq
        %v1720 = vshrl.u32 %v1719, 7
        %v1721 = vsub.s32 %v1718, %v1720
        %v1722 = vrot.slane %v1714, %v1721
        %v1724 = vunpack.c.l.s4 1983009808
        %v1725 = vunpack.c.0.s8 %v1724
        %v1726 = vlaneseq
        %v1727 = vshrl.u32 %v1726, 7
        %v1728 = vsub.s32 %v1725, %v1727
        %v1729 = vrot.slane %v1715, %v1728
        %v1730 = vcombine.low %v1634, %v1698
        %v1731 = vcombine.high %v1634, %v1698
        %v1733 = vunpack.c.l.s4 1983009808
        %v1734 = vunpack.c.0.s8 %v1733
        %v1735 = vlaneseq
        %v1736 = vshrl.u32 %v1735, 7
        %v1737 = vsub.s32 %v1734, %v1736
        %v1738 = vrot.slane %v1730, %v1737
        %v1740 = vunpack.c.l.s4 1983009808
        %v1741 = vunpack.c.0.s8 %v1740
        %v1742 = vlaneseq
        %v1743 = vshrl.u32 %v1742, 7
        %v1744 = vsub.s32 %v1741, %v1743
        %v1745 = vrot.slane %v1731, %v1744
        %v1746 = vcombine.low %v1722, %v1738
        %v1747 = vcombine.high %v1722, %v1738
        %v1749 = vunpack.c.l.s4 1934713408
        %v1750 = vunpack.c.0.s8 %v1749
        %v1751 = vlaneseq
        %v1752 = vshrl.u32 %v1751, 7
        %v1753 = vsub.s32 %v1750, %v1752
        %v1754 = vrot.slane %v1746, %v1753
        %v1756 = vunpack.c.l.s4 1934713408
        %v1757 = vunpack.c.0.s8 %v1756
        %v1758 = vlaneseq
        %v1759 = vshrl.u32 %v1758, 7
        %v1760 = vsub.s32 %v1757, %v1759
        %v1761 = vrot.slane %v1747, %v1760
        %v1762 = vcombine.low %v1729, %v1745
        %v1763 = vcombine.high %v1729, %v1745
        %v1765 = vunpack.c.l.s4 1934713408
        %v1766 = vunpack.c.0.s8 %v1765
        %v1767 = vlaneseq
        %v1768 = vshrl.u32 %v1767, 7
        %v1769 = vsub.s32 %v1766, %v1768
        %v1770 = vrot.slane %v1762, %v1769
        %v1772 = vunpack.c.l.s4 1934713408
        %v1773 = vunpack.c.0.s8 %v1772
        %v1774 = vlaneseq
        %v1775 = vshrl.u32 %v1774, 7
        %v1776 = vsub.s32 %v1773, %v1775
        %v1777 = vrot.slane %v1763, %v1776
        %v1778 = vcombine.high %v1754, 0.0
        %v1779 = vcombine.high %v1761, 0.0
        %v1780 = vcombine.high %v1770, 0.0
        %v1781 = vcombine.high %v1777, 0.0
        %v1782 = vcombine.low %v1754, %v1761
        %v1784 = vunpack.c.l.s4 1983009808
        %v1785 = vunpack.c.0.s8 %v1784
        %v1786 = vlaneseq
        %v1787 = vshrl.u32 %v1786, 7
        %v1788 = vsub.s32 %v1785, %v1787
        %v1789 = vrot.slane %v1782, %v1788
        %v1790 = vcombine.low %v1778, %v1779
        %v1792 = vunpack.c.l.s4 1983009808
        %v1793 = vunpack.c.0.s8 %v1792
        %v1794 = vlaneseq
        %v1795 = vshrl.u32 %v1794, 7
        %v1796 = vsub.s32 %v1793, %v1795
        %v1797 = vrot.slane %v1790, %v1796
        %v1798 = vcombine.low %v1770, %v1777
        %v1800 = vunpack.c.l.s4 1983009808
        %v1801 = vunpack.c.0.s8 %v1800
        %v1802 = vlaneseq
        %v1803 = vshrl.u32 %v1802, 7
        %v1804 = vsub.s32 %v1801, %v1803
        %v1805 = vrot.slane %v1798, %v1804
        %v1806 = vcombine.low %v1780, %v1781
        %v1808 = vunpack.c.l.s4 1983009808
        %v1809 = vunpack.c.0.s8 %v1808
        %v1810 = vlaneseq
        %v1811 = vshrl.u32 %v1810, 7
        %v1812 = vsub.s32 %v1809, %v1811
        %v1813 = vrot.slane %v1806, %v1812
        %v1814 = vcombine.low %v1789, %v1797
        %v1815 = vcombine.high %v1789, %v1797
        %v1817 = vunpack.c.l.s4 1934713408
        %v1818 = vunpack.c.0.s8 %v1817
        %v1819 = vlaneseq
        %v1820 = vshrl.u32 %v1819, 7
        %v1821 = vsub.s32 %v1818, %v1820
        %v1822 = vrot.slane %v1814, %v1821
        %v1824 = vunpack.c.l.s4 1934713408
        %v1825 = vunpack.c.0.s8 %v1824
        %v1826 = vlaneseq
        %v1827 = vshrl.u32 %v1826, 7
        %v1828 = vsub.s32 %v1825, %v1827
        %v1829 = vrot.slane %v1815, %v1828
        %v1830 = vcombine.low %v1805, %v1813
        %v1831 = vcombine.high %v1805, %v1813
        %v1833 = vunpack.c.l.s4 1934713408
        %v1834 = vunpack.c.0.s8 %v1833
        %v1835 = vlaneseq
        %v1836 = vshrl.u32 %v1835, 7
        %v1837 = vsub.s32 %v1834, %v1836
        %v1838 = vrot.slane %v1830, %v1837
        %v1840 = vunpack.c.l.s4 1934713408
        %v1841 = vunpack.c.0.s8 %v1840
        %v1842 = vlaneseq
        %v1843 = vshrl.u32 %v1842, 7
        %v1844 = vsub.s32 %v1841, %v1843
        %v1845 = vrot.slane %v1831, %v1844
        %v1846 = vcombine.low %v1822, %v1838
        %v1847 = vcombine.high %v1822, %v1838
        %v1848 = vcombine.low %v1829, %v1845
        %v1849 = vcombine.high %v1829, %v1845
        %1851 = vrot.lane.b32.xlu0 %v1847, 8
        %v1852 = vpop.permute.xlu0 %1851
        %1855 = vrot.lane.b32.xlu0 %v1848, 16
        %v1856 = vpop.permute.xlu0 %1855
        %1859 = vrot.lane.b32.xlu0 %v1849, 24
        %v1860 = vpop.permute.xlu0 %1859
        %v1862 = vsel %vm810, %v1846, %v1852
        %vm1863 = vcmask 130048
        %v1864 = vsel %vm1863, %v1862, %v1856
        %vm1865 = vcmask 195584
        %v1866 = vsel %vm1865, %v1864, %v1860
        %v1867 = vld [vmem:[#allocation10] sm:$0xff]
        %v1868 = vld [vmem:[#allocation10 + $0x8] sm:$0xff]
        %v1869 = vld [vmem:[#allocation10 + $0x10] sm:$0xff]
        %v1870 = vld [vmem:[#allocation10 + $0x18] sm:$0xff]
        %v1871 = vld [vmem:[%s8] sm:$0x1]
        %v1873 = vlaneseq
        %v1874 = vshrl.u32 %v1873, 7
        %v1875 = vsub.s32 0, %v1874
        %v1876 = vrot.slane %v1871, %v1875
        %v1879 = vsel %vm418, %v1866, 0
        %1881 = vmatprep.subr.mxu0 0.0
        %1882 = vmatpush1.msra.mxu0 %v1867
        %1883 = vmatprep.subr.mxu0 0.0
        %1884 = vmatpush1.msra.mxu0 %v1868
        %1885 = vmatprep.subr.mxu0 0.0
        %1886 = vmatpush1.msra.mxu0 %v1869
        %1887 = vmatprep.subr.mxu0 0.0
        %1888 = vmatpush1.msra.mxu0 %v1870
        %1889 = vmatprep.subr.mxu0 0.0
        %1890 = vmatpush1.msra.mxu0 0.0
        %1891 = vmatprep.subr.mxu0 0.0
        %1892 = vmatpush1.msra.mxu0 0.0
        %1893 = vmatprep.subr.mxu0 0.0
        %1894 = vmatpush1.msra.mxu0 0.0
        %1895 = vmatprep.subr.mxu0 0.0
        %1896 = vmatpush1.msra.mxu0 0.0
        %1897 = vmatprep.subr.mxu0 0.0
        %1898 = vmatpush1.msra.mxu0 0.0
        %1899 = vmatprep.subr.mxu0 0.0
        %1900 = vmatpush1.msra.mxu0 0.0
        %1901 = vmatprep.subr.mxu0 0.0
        %1902 = vmatpush1.msra.mxu0 0.0
        %1903 = vmatprep.subr.mxu0 0.0
        %1904 = vmatpush1.msra.mxu0 0.0
        %1905 = vmatprep.subr.mxu0 0.0
        %1906 = vmatpush1.msra.mxu0 0.0
        %1907 = vmatprep.subr.mxu0 0.0
        %1908 = vmatpush1.msra.mxu0 0.0
        %1909 = vmatprep.subr.mxu0 0.0
        %1910 = vmatpush1.msra.mxu0 0.0
        %1911 = vmatprep.subr.mxu0 0.0
        %1912 = vmatpush1.msra.mxu0 0.0
        %1913 = vmatprep.subr.mxu0 0.0
        %1914 = vmatpush1.msra.mxu0 0.0
        %1915 = vmatprep.subr.mxu0 0.0
        %1916 = vmatpush1.msra.mxu0 0.0
        %1917 = vmatprep.subr.mxu0 0.0
        %1918 = vmatpush1.msra.mxu0 0.0
        %1919 = vmatprep.subr.mxu0 0.0
        %1920 = vmatpush1.msra.mxu0 0.0
        %1921 = vmatprep.subr.mxu0 0.0
        %1922 = vmatpush1.msra.mxu0 0.0
        %1923 = vmatprep.subr.mxu0 0.0
        %1924 = vmatpush1.msra.mxu0 0.0
        %1925 = vmatprep.subr.mxu0 0.0
        %1926 = vmatpush1.msra.mxu0 0.0
        %1927 = vmatprep.subr.mxu0 0.0
        %1928 = vmatpush1.msra.mxu0 0.0
        %1929 = vmatprep.subr.mxu0 0.0
        %1930 = vmatpush1.msra.mxu0 0.0
        %1931 = vmatprep.subr.mxu0 0.0
        %1932 = vmatpush1.msra.mxu0 0.0
        %1933 = vmatprep.subr.mxu0 0.0
        %1934 = vmatpush1.msra.mxu0 0.0
        %1935 = vmatprep.subr.mxu0 0.0
        %1936 = vmatpush1.msra.mxu0 0.0
        %1937 = vmatprep.subr.mxu0 0.0
        %1938 = vmatpush1.msra.mxu0 0.0
        %1939 = vmatprep.subr.mxu0 0.0
        %1940 = vmatpush1.msra.mxu0 0.0
        %1941 = vmatprep.subr.mxu0 0.0
        %1942 = vmatpush1.msra.mxu0 0.0
        %1943 = vmatprep.subr.mxu0 0.0
        %1944 = vmatpush1.msra.mxu0 0.0
        %1945 = vmatprep.mubr.f32.mxu0 0.0
        %1946 = vmatmul.mubr.f32.gmra.mrb[0].mxu0 %v1879
        %v1947 = vpop.f32.mrb[0].mxu0
        %v1948 = vadd.f32 %v1876, %v1947
        %v1949 = vpop.f32.mrb[0].mxu0
        %1950 = vdwg.mxu0
        %1951 = vst.msk [vmem:[%s405] sm:$0xff] %vm418, %v1948
        %s1952 = sand.u32 %s230, 1
        %s1953 = scalar_lea.sflag [#allocation4], %s1952
        %s1954 = sand.u32 %s230, 1
        %s1955 = smul.addr %s1954, 8
        %s1956 = scalar_lea.vmem [#allocation11], %s1955
        // Predicated region
        $region77: #{tpu_custom_call.1} parent=55 // pred_check
          %p1957 = pneg %p240
        $region78: #{tpu_custom_call.1} parent=55 // pred_check_branch
          %1959 = sbr.rel (%p1957) target = $region80
        $region79: #{tpu_custom_call.1} parent=55 // pred_region
          %s1961 = ssub.s32 128, 128
          %1962 = vsyncadd %s1953, %s1961
          %s1963 = smul.addr %s28, 128
          %s1964 = scalar_lea.hbm %s9, %s1963
          %s1966 = sshll.u32 %s1956, 4
          %s1967 = int_to_ptr.vmem [resolvable:$true] %s1966
          %1969 = dma.vmem_to_hbm [thread:$0]  %s1967, 128, %s1964, %s1953
        $region80: #{tpu_custom_call.1} parent=55 // pred_fallthru
          _
      $region56: #{tpu_custom_call.1} parent=5 // pred_fallthru
        _
      %p1970 = scmp.le.s32.totalorder 2, %s23
      // Predicated region
      $region81: #{tpu_custom_call.1} parent=5 // pred_check
        %p1971 = pneg %p1970
      $region82: #{tpu_custom_call.1} parent=5 // pred_check_branch
        %1973 = sbr.rel (%p1971) target = $region84
      $region83: #{tpu_custom_call.1} parent=5 // pred_region
        %s1974 = ssub.s32 %s23, 2
        // Predicated region
        $region85: #{tpu_custom_call.1} parent=83 // pred_check
          %p1975 = pneg %p246
        $region86: #{tpu_custom_call.1} parent=83 // pred_check_branch
          %1977 = sbr.rel (%p1975) target = $region88
        $region87: #{tpu_custom_call.1} parent=83 // pred_region
          %s1978 = sand.u32 %s231, 1
          %s1979 = scalar_lea.sflag [#allocation4], %s1978
          %s1980 = sand.u32 %s231, 1
          %s1981 = smul.addr %s1980, 8
          %s1982 = scalar_lea.vmem [#allocation11], %s1981
          %1983 = dma.done %s1979, 128
        $region88: #{tpu_custom_call.1} parent=83 // pred_fallthru
          _
      $region84: #{tpu_custom_call.1} parent=5 // pred_fallthru
        _
    $region6: #{tpu_custom_call.1} parent=1 // loop_footer
      %s27 = sadd.s32 1, %s23
    $region7: #{tpu_custom_call.1} parent=1 // loop_footer_branch
      %22 = sbr.rel target = $region3
    $region8: #{tpu_custom_call.1} parent=1 // loop_exit
      _
    %1984 = vsyncpa [#allocation3], 1
    %s1985 = scalar_lea.sflag [#allocation3], 1
    %1986 = vsyncpa %s1985, 1
    %1987 = vsyncpa [#allocation6], 1
    %1988 = vsyncpa [#allocation9], 1
    %1989 = vsyncpa [#allocation4], 1
    %s1990 = scalar_lea.sflag [#allocation4], 1
    %1991 = vsyncpa %s1990, 1

</llo_original>
